<compile_context>
chip_gen: v5e
topology: v5e:2x2
jax: 0.10.0
libtpu: 0.0.40
codegen_flags: <defaults>
</compile_context>

<pallas_src>
import jax
import jax.numpy as jnp
from jax.experimental import pallas as pl
from jax.experimental.pallas import tpu as pltpu


def _round_up(x, m):
    return ((x + m - 1) // m) * m


def _edge_fused_kernel(
        src_nf_ref, s_f_ref, dst_nf_ref, src_wv_ref, dst_wv_ref,
        vw1a_ref, vw1b_ref, vw1c_ref, vb1_ref, vw2_ref,
        lw1a_ref, lw1b_ref, lb1_ref, lw2_ref, b2_ref,
        o_ref):
    f32 = jnp.float32
    bf16 = jnp.bfloat16

    # ---- visual branch, layer 1: cat([src n_f, s_f, dst n_f]) @ W1 rewritten
    #      as three lane-dense bf16 matmuls into one f32 accumulator.
    h = jnp.dot(src_nf_ref[...], vw1a_ref[...], preferred_element_type=f32)
    h = h + jnp.dot(s_f_ref[...], vw1b_ref[...], preferred_element_type=f32)
    h = h + jnp.dot(dst_nf_ref[...], vw1c_ref[...], preferred_element_type=f32)
    h = jnp.maximum(h + vb1_ref[...], 0.0).astype(bf16)

    # ---- language branch, layer 1: cat([src w2v, dst w2v]) @ W1, likewise.
    g = jnp.dot(src_wv_ref[...], lw1a_ref[...], preferred_element_type=f32)
    g = g + jnp.dot(dst_wv_ref[...], lw1b_ref[...], preferred_element_type=f32)
    g = jnp.maximum(g + lb1_ref[...], 0.0).astype(bf16)

    # ---- merged layer 2: vw2/lw2 occupy disjoint lane ranges of one
    #      (hidden, 128) matrix, so both results land in a single f32
    #      accumulator and ONE unmasked lane-dense store.
    y = jnp.dot(h, vw2_ref[...], preferred_element_type=f32)
    y = y + jnp.dot(g, lw2_ref[...], preferred_element_type=f32)
    o_ref[...] = jnp.maximum(y + b2_ref[...], 0.0).astype(o_ref.dtype)


def fused_edge_mlps(src_nf, s_f, dst_nf, src_wv, dst_wv,
                    vw1a, vw1b, vw1c, vb1, vw2c,
                    lw1a, lw1b, lb1, lw2c, b2c,
                    *, max_block_e=1024, min_grid_steps=2):
    """Both edge-MLP branches in one pallas_call, tiled over the edge dim.

    Returns a single (E, out_pad) f32 slab: vis result in lanes [0, ov),
    lang result in lanes [ov, ov + ol).
    """
    E = src_nf.shape[0]
    out_pad = vw2c.shape[1]

    if E == 0:                                   # no edges: nothing to launch
        return jnp.zeros((0, out_pad), jnp.float32)

    dn = src_nf.shape[1]
    ds = s_f.shape[1]
    dw = src_wv.shape[1]
    hv = vw1a.shape[1]
    hl = lw1a.shape[1]

    # Tile choice: as large as useful for the HBM roofline, but keep at least
    # `min_grid_steps` grid steps when E allows so both v7x TCs get work.
    block_e = min(max_block_e,
                  max(8, _round_up(-(-E // min_grid_steps), 8)))
    grid = (pl.cdiv(E, block_e),)                # ragged last tile, no padding

    def row_spec(d):
        return pl.BlockSpec((block_e, d), lambda i: (i, 0))

    def const_spec(shape):
        return pl.BlockSpec(shape, lambda i: (0, 0))

    flops = 2 * E * ((2 * dn + ds) * hv + 2 * dw * hl + (hv + hl) * out_pad)
    bytes_accessed = (
        2 * E * (2 * dn + ds + 2 * dw)                          # bf16 rows in
        + 4 * E * out_pad                                       # f32 out
        + 2 * ((2 * dn + ds) * hv + 2 * dw * hl + (hv + hl) * out_pad)  # bf16 W
        + 4 * (hv + hl + out_pad))                              # f32 biases

    out = pl.pallas_call(
        _edge_fused_kernel,
        out_shape=jax.ShapeDtypeStruct((E, out_pad), jnp.float32),
        grid_spec=pl.GridSpec(
            grid=grid,
            in_specs=[
                row_spec(dn), row_spec(ds), row_spec(dn),
                row_spec(dw), row_spec(dw),
                const_spec((dn, hv)), const_spec((ds, hv)), const_spec((dn, hv)),
                const_spec((1, hv)), const_spec((hv, out_pad)),
                const_spec((dw, hl)), const_spec((dw, hl)),
                const_spec((1, hl)), const_spec((hl, out_pad)),
                const_spec((1, out_pad)),
            ],
            out_specs=pl.BlockSpec((block_e, out_pad), lambda i: (i, 0)),
        ),
        compiler_params=pltpu.CompilerParams(
            dimension_semantics=("parallel",)),
        cost_estimate=pl.CostEstimate(
            flops=flops, transcendentals=0, bytes_accessed=bytes_accessed),
    )(src_nf, s_f, dst_nf, src_wv, dst_wv,
      vw1a, vw1b, vw1c, vb1, vw2c,
      lw1a, lw1b, lb1, lw2c, b2c)

    return out


def _init_linear(key, d_in, d_out):
    """Deterministic Kaiming-uniform-ish init (matches nn.Linear bounds)."""
    kw, kb = jax.random.split(key)
    bound = 1.0 / jnp.sqrt(jnp.float32(d_in))
    w = jax.random.uniform(kw, (d_in, d_out), jnp.float32, -bound, bound)
    b = jax.random.uniform(kb, (1, d_out), jnp.float32, -bound, bound)
    return w, b


class H_H_EdgeApplyModulePallas:
    """JAX/Pallas port of H_H_EdgeApplyModule.forward (use_cbs=False)."""

    def __init__(self, key, dims):
        n_f = dims["n_f"]
        s_f_d = dims["s_f"]
        w2v = dims["word2vec"]
        hv, ov = dims["vis_hidden"], dims["vis_out"]
        hl, ol = dims["lang_hidden"], dims["lang_out"]
        bf = jnp.bfloat16

        kv1, kv2, kl1, kl2 = jax.random.split(key, 4)
        # edge_fc: in = n_f + s_f + n_f (CONFIG.G_E_L_S[0])
        vw1, vb1 = _init_linear(kv1, 2 * n_f + s_f_d, hv)
        vw2, vb2 = _init_linear(kv2, hv, ov)
        # edge_fc_lang: in = 2 * word2vec (CONFIG.G_E_L_S2[0])
        lw1, lb1 = _init_linear(kl1, 2 * w2v, hl)
        lw2, lb2 = _init_linear(kl2, hl, ol)

        # bf16 matmul weights (f32 accumulation keeps precision), f32 biases.
        vw1_b, vw2_b = vw1.astype(bf), vw2.astype(bf)
        lw1_b, lw2_b = lw1.astype(bf), lw2.astype(bf)
        self._ref_params = (vw1_b, vb1, vw2_b, vb2, lw1_b, lb1, lw2_b, lb2)

        # --- split first-layer weights along the concat axis (concat-free).
        self.vw1a = vw1_b[:n_f]
        self.vw1b = vw1_b[n_f:n_f + s_f_d]
        self.vw1c = vw1_b[n_f + s_f_d:]
        self.vb1 = vb1                      # (1, hv) f32
        self.lw1a = lw1_b[:w2v]
        self.lw1b = lw1_b[w2v:]
        self.lb1 = lb1                      # (1, hl) f32

        # --- merge both second layers into one lane-packed (., 128) slab:
        #     vis output in lanes [0, ov), lang output in lanes [ov, ov+ol).
        out_tot = ov + ol
        out_pad = _round_up(out_tot, 128)
        self.vw2c = jnp.zeros((hv, out_pad), bf).at[:, :ov].set(vw2_b)
        self.lw2c = jnp.zeros((hl, out_pad), bf).at[:, ov:out_tot].set(lw2_b)
        b2c = jnp.zeros((1, out_pad), jnp.float32)
        self.b2c = b2c.at[:, :ov].set(vb2).at[:, ov:out_tot].set(lb2)

        self.vis_out = ov
        self.lang_out = ol

    def __call__(self, edge):
        bf = jnp.bfloat16
        # bf16 input casts are elementwise and fuse with the upstream gather
        # under jit; inside the kernel they halve per-row HBM reads.
        out = fused_edge_mlps(
            edge["src"]["n_f"].astype(bf),
            edge["data"]["s_f"].astype(bf),
            edge["dst"]["n_f"].astype(bf),
            edge["src"]["word2vec"].astype(bf),
            edge["dst"]["word2vec"].astype(bf),
            self.vw1a, self.vw1b, self.vw1c, self.vb1, self.vw2c,
            self.lw1a, self.lw1b, self.lb1, self.lw2c, self.b2c)
        ov, ol = self.vis_out, self.lang_out
        return {"e_f": out[:, :ov], "e_f_lang": out[:, ov:ov + ol]}


def _reference(edge, m):
    """Pure-JAX reference (same bf16-in / f32-accumulate numerics)."""
    vw1, vb1, vw2, vb2, lw1, lb1, lw2, lb2 = m._ref_params
    bf, f32 = jnp.bfloat16, jnp.float32

    def mlp(x, w1, b1, w2, b2):
        h = jnp.dot(x.astype(bf), w1, preferred_element_type=f32) + b1
        h = jnp.maximum(h, 0.0).astype(bf)
        y = jnp.dot(h, w2, preferred_element_type=f32) + b2
        return jnp.maximum(y, 0.0)

    feat = jnp.concatenate(
        [edge["src"]["n_f"], edge["data"]["s_f"], edge["dst"]["n_f"]], axis=1)
    feat_lang = jnp.concatenate(
        [edge["src"]["word2vec"], edge["dst"]["word2vec"]], axis=1)
    return {"e_f": mlp(feat, vw1, vb1, vw2, vb2),
            "e_f_lang": mlp(feat_lang, lw1, lb1, lw2, lb2)}


if __name__ == "__main__":
    key = jax.random.PRNGKey(0)
    k_param, k_nf, k_w2v, k_sf, k_src, k_dst = jax.random.split(key, 6)

    N = 10   # graph nodes
    E = 37   # graph edges (non-multiple of 8: exercises ragged last tile)
    dims = dict(
        n_f=64, s_f=64, vis_hidden=128, vis_out=64,
        word2vec=32, lang_hidden=64, lang_out=32,
    )

    # Node / edge features + connectivity.
    node_nf = jax.random.normal(k_nf, (N, dims["n_f"]), jnp.float32)
    node_w2v = jax.random.normal(k_w2v, (N, dims["word2vec"]), jnp.float32)
    edge_sf = jax.random.normal(k_sf, (E, dims["s_f"]), jnp.float32)
    src_ids = jax.random.randint(k_src, (E,), 0, N)
    dst_ids = jax.random.randint(k_dst, (E,), 0, N)

    # DGL presents per-edge gathered src/dst features to the edge UDF; the
    # gather is a plain XLA take (data-dependent, kept outside the kernel).
    edge = {
        "src": {"n_f": jnp.take(node_nf, src_ids, axis=0),
                "word2vec": jnp.take(node_w2v, src_ids, axis=0)},
        "dst": {"n_f": jnp.take(node_nf, dst_ids, axis=0),
                "word2vec": jnp.take(node_w2v, dst_ids, axis=0)},
        "data": {"s_f": edge_sf},
    }

    module = H_H_EdgeApplyModulePallas(k_param, dims)

    out = module(edge)
    jax.block_until_ready(out)

    ref = _reference(edge, module)
    assert out["e_f"].shape == (E, dims["vis_out"])
    assert out["e_f_lang"].shape == (E, dims["lang_out"])
    assert jnp.allclose(out["e_f"], ref["e_f"], atol=2e-3, rtol=2e-3)
    assert jnp.allclose(out["e_f_lang"], ref["e_f_lang"], atol=2e-3, rtol=2e-3)

    print("KERNEL_OK")
</pallas_src>

<mosaic_0001>
module attributes {stable_mosaic.version = 11 : i64} {
  func.func @_edge_fused_kernel(%arg0: i32, %arg1: memref<24x64xbf16, #tpu.memory_space<vmem>>, %arg2: memref<24x64xbf16, #tpu.memory_space<vmem>>, %arg3: memref<24x64xbf16, #tpu.memory_space<vmem>>, %arg4: memref<24x32xbf16, #tpu.memory_space<vmem>>, %arg5: memref<24x32xbf16, #tpu.memory_space<vmem>>, %arg6: memref<64x128xbf16, #tpu.memory_space<vmem>>, %arg7: memref<64x128xbf16, #tpu.memory_space<vmem>>, %arg8: memref<64x128xbf16, #tpu.memory_space<vmem>>, %arg9: memref<1x128xf32, #tpu.memory_space<vmem>>, %arg10: memref<128x128xbf16, #tpu.memory_space<vmem>>, %arg11: memref<32x64xbf16, #tpu.memory_space<vmem>>, %arg12: memref<32x64xbf16, #tpu.memory_space<vmem>>, %arg13: memref<1x64xf32, #tpu.memory_space<vmem>>, %arg14: memref<64x128xbf16, #tpu.memory_space<vmem>>, %arg15: memref<1x128xf32, #tpu.memory_space<vmem>>, %arg16: memref<24x128xf32, #tpu.memory_space<vmem>>) attributes {dimension_semantics = [#tpu.dimension_semantics<parallel>], iteration_bounds = array<i64: 2>, scalar_prefetch = 0 : i64, scratch_operands = 0 : i64, tpu.core_type = #tpu.core_type<tc>, window_params = [{transform_indices = @transform_0, window_bounds = array<i64: 24, 64>}, {transform_indices = @transform_1, window_bounds = array<i64: 24, 64>}, {transform_indices = @transform_2, window_bounds = array<i64: 24, 64>}, {transform_indices = @transform_3, window_bounds = array<i64: 24, 32>}, {transform_indices = @transform_4, window_bounds = array<i64: 24, 32>}, {pipeline_mode = #tpu.pipeline_mode<synchronous>, transform_indices = @transform_5, window_bounds = array<i64: 64, 128>}, {pipeline_mode = #tpu.pipeline_mode<synchronous>, transform_indices = @transform_6, window_bounds = array<i64: 64, 128>}, {pipeline_mode = #tpu.pipeline_mode<synchronous>, transform_indices = @transform_7, window_bounds = array<i64: 64, 128>}, {pipeline_mode = #tpu.pipeline_mode<synchronous>, transform_indices = @transform_8, window_bounds = array<i64: 1, 128>}, {pipeline_mode = #tpu.pipeline_mode<synchronous>, transform_indices = @transform_9, window_bounds = array<i64: 128, 128>}, {pipeline_mode = #tpu.pipeline_mode<synchronous>, transform_indices = @transform_10, window_bounds = array<i64: 32, 64>}, {pipeline_mode = #tpu.pipeline_mode<synchronous>, transform_indices = @transform_11, window_bounds = array<i64: 32, 64>}, {pipeline_mode = #tpu.pipeline_mode<synchronous>, transform_indices = @transform_12, window_bounds = array<i64: 1, 64>}, {pipeline_mode = #tpu.pipeline_mode<synchronous>, transform_indices = @transform_13, window_bounds = array<i64: 64, 128>}, {pipeline_mode = #tpu.pipeline_mode<synchronous>, transform_indices = @transform_14, window_bounds = array<i64: 1, 128>}, {transform_indices = @transform_15, window_bounds = array<i64: 24, 128>}]} {
    %c0 = arith.constant 0 : index
    %c0_0 = arith.constant 0 : index
    %0 = vector.load %arg1[%c0, %c0_0] : memref<24x64xbf16, #tpu.memory_space<vmem>>, vector<24x64xbf16>
    %c0_1 = arith.constant 0 : index
    %c0_2 = arith.constant 0 : index
    %1 = vector.load %arg6[%c0_1, %c0_2] : memref<64x128xbf16, #tpu.memory_space<vmem>>, vector<64x128xbf16>
    %cst = arith.constant dense<0.000000e+00> : vector<24x128xf32>
    %2 = tpu.matmul %0, %1, %cst {dimension_numbers = #tpu.dot_dimension_numbers<[1], [0], [0], [1], [0, 0, 1, 1], [], []>} : vector<24x64xbf16>, vector<64x128xbf16>, vector<24x128xf32> -> vector<24x128xf32>
    %c0_3 = arith.constant 0 : index
    %c0_4 = arith.constant 0 : index
    %3 = vector.load %arg2[%c0_3, %c0_4] : memref<24x64xbf16, #tpu.memory_space<vmem>>, vector<24x64xbf16>
    %c0_5 = arith.constant 0 : index
    %c0_6 = arith.constant 0 : index
    %4 = vector.load %arg7[%c0_5, %c0_6] : memref<64x128xbf16, #tpu.memory_space<vmem>>, vector<64x128xbf16>
    %cst_7 = arith.constant dense<0.000000e+00> : vector<24x128xf32>
    %5 = tpu.matmul %3, %4, %cst_7 {dimension_numbers = #tpu.dot_dimension_numbers<[1], [0], [0], [1], [0, 0, 1, 1], [], []>} : vector<24x64xbf16>, vector<64x128xbf16>, vector<24x128xf32> -> vector<24x128xf32>
    %6 = arith.addf %2, %5 : vector<24x128xf32>
    %c0_8 = arith.constant 0 : index
    %c0_9 = arith.constant 0 : index
    %7 = vector.load %arg3[%c0_8, %c0_9] : memref<24x64xbf16, #tpu.memory_space<vmem>>, vector<24x64xbf16>
    %c0_10 = arith.constant 0 : index
    %c0_11 = arith.constant 0 : index
    %8 = vector.load %arg8[%c0_10, %c0_11] : memref<64x128xbf16, #tpu.memory_space<vmem>>, vector<64x128xbf16>
    %cst_12 = arith.constant dense<0.000000e+00> : vector<24x128xf32>
    %9 = tpu.matmul %7, %8, %cst_12 {dimension_numbers = #tpu.dot_dimension_numbers<[1], [0], [0], [1], [0, 0, 1, 1], [], []>} : vector<24x64xbf16>, vector<64x128xbf16>, vector<24x128xf32> -> vector<24x128xf32>
    %10 = arith.addf %6, %9 : vector<24x128xf32>
    %c0_13 = arith.constant 0 : index
    %c0_14 = arith.constant 0 : index
    %11 = vector.load %arg9[%c0_13, %c0_14] : memref<1x128xf32, #tpu.memory_space<vmem>>, vector<1x128xf32>
    %12 = vector.broadcast %11 : vector<1x128xf32> to vector<24x128xf32>
    %13 = arith.addf %10, %12 : vector<24x128xf32>
    %cst_15 = arith.constant 0.000000e+00 : f32
    %14 = vector.broadcast %cst_15 : f32 to vector<24x128xf32>
    %15 = arith.maximumf %13, %14 : vector<24x128xf32>
    %16 = arith.truncf %15 : vector<24x128xf32> to vector<24x128xbf16>
    %c0_16 = arith.constant 0 : index
    %c0_17 = arith.constant 0 : index
    %17 = vector.load %arg4[%c0_16, %c0_17] : memref<24x32xbf16, #tpu.memory_space<vmem>>, vector<24x32xbf16>
    %c0_18 = arith.constant 0 : index
    %c0_19 = arith.constant 0 : index
    %18 = vector.load %arg11[%c0_18, %c0_19] : memref<32x64xbf16, #tpu.memory_space<vmem>>, vector<32x64xbf16>
    %cst_20 = arith.constant dense<0.000000e+00> : vector<24x64xf32>
    %19 = tpu.matmul %17, %18, %cst_20 {dimension_numbers = #tpu.dot_dimension_numbers<[1], [0], [0], [1], [0, 0, 1, 1], [], []>} : vector<24x32xbf16>, vector<32x64xbf16>, vector<24x64xf32> -> vector<24x64xf32>
    %c0_21 = arith.constant 0 : index
    %c0_22 = arith.constant 0 : index
    %20 = vector.load %arg5[%c0_21, %c0_22] : memref<24x32xbf16, #tpu.memory_space<vmem>>, vector<24x32xbf16>
    %c0_23 = arith.constant 0 : index
    %c0_24 = arith.constant 0 : index
    %21 = vector.load %arg12[%c0_23, %c0_24] : memref<32x64xbf16, #tpu.memory_space<vmem>>, vector<32x64xbf16>
    %cst_25 = arith.constant dense<0.000000e+00> : vector<24x64xf32>
    %22 = tpu.matmul %20, %21, %cst_25 {dimension_numbers = #tpu.dot_dimension_numbers<[1], [0], [0], [1], [0, 0, 1, 1], [], []>} : vector<24x32xbf16>, vector<32x64xbf16>, vector<24x64xf32> -> vector<24x64xf32>
    %23 = arith.addf %19, %22 : vector<24x64xf32>
    %c0_26 = arith.constant 0 : index
    %c0_27 = arith.constant 0 : index
    %24 = vector.load %arg13[%c0_26, %c0_27] : memref<1x64xf32, #tpu.memory_space<vmem>>, vector<1x64xf32>
    %25 = vector.broadcast %24 : vector<1x64xf32> to vector<24x64xf32>
    %26 = arith.addf %23, %25 : vector<24x64xf32>
    %cst_28 = arith.constant 0.000000e+00 : f32
    %27 = vector.broadcast %cst_28 : f32 to vector<24x64xf32>
    %28 = arith.maximumf %26, %27 : vector<24x64xf32>
    %29 = arith.truncf %28 : vector<24x64xf32> to vector<24x64xbf16>
    %c0_29 = arith.constant 0 : index
    %c0_30 = arith.constant 0 : index
    %30 = vector.load %arg10[%c0_29, %c0_30] : memref<128x128xbf16, #tpu.memory_space<vmem>>, vector<128x128xbf16>
    %cst_31 = arith.constant dense<0.000000e+00> : vector<24x128xf32>
    %31 = tpu.matmul %16, %30, %cst_31 {dimension_numbers = #tpu.dot_dimension_numbers<[1], [0], [0], [1], [0, 0, 1, 1], [], []>} : vector<24x128xbf16>, vector<128x128xbf16>, vector<24x128xf32> -> vector<24x128xf32>
    %c0_32 = arith.constant 0 : index
    %c0_33 = arith.constant 0 : index
    %32 = vector.load %arg14[%c0_32, %c0_33] : memref<64x128xbf16, #tpu.memory_space<vmem>>, vector<64x128xbf16>
    %cst_34 = arith.constant dense<0.000000e+00> : vector<24x128xf32>
    %33 = tpu.matmul %29, %32, %cst_34 {dimension_numbers = #tpu.dot_dimension_numbers<[1], [0], [0], [1], [0, 0, 1, 1], [], []>} : vector<24x64xbf16>, vector<64x128xbf16>, vector<24x128xf32> -> vector<24x128xf32>
    %34 = arith.addf %31, %33 : vector<24x128xf32>
    %c0_35 = arith.constant 0 : index
    %c0_36 = arith.constant 0 : index
    %35 = vector.load %arg15[%c0_35, %c0_36] : memref<1x128xf32, #tpu.memory_space<vmem>>, vector<1x128xf32>
    %36 = vector.broadcast %35 : vector<1x128xf32> to vector<24x128xf32>
    %37 = arith.addf %34, %36 : vector<24x128xf32>
    %cst_37 = arith.constant 0.000000e+00 : f32
    %38 = vector.broadcast %cst_37 : f32 to vector<24x128xf32>
    %39 = arith.maximumf %37, %38 : vector<24x128xf32>
    %c0_38 = arith.constant 0 : index
    %c0_39 = arith.constant 0 : index
    %40 = vector.load %arg16[%c0_38, %c0_39] : memref<24x128xf32, #tpu.memory_space<vmem>>, vector<24x128xf32>
    tpu.vector_store %arg16[%c0_38, %c0_39], %39 {strides = array<i32>} : memref<24x128xf32, #tpu.memory_space<vmem>>, vector<24x128xf32>,
    return
  }
  func.func @transform_0(%arg0: i32) -> (i32, i32) {
    %c0_i32 = arith.constant 0 : i32
    %c0_i32_0 = arith.constant 0 : i32
    return %arg0, %c0_i32 : i32, i32
  }
  func.func @transform_1(%arg0: i32) -> (i32, i32) {
    %c0_i32 = arith.constant 0 : i32
    %c0_i32_0 = arith.constant 0 : i32
    return %arg0, %c0_i32 : i32, i32
  }
  func.func @transform_2(%arg0: i32) -> (i32, i32) {
    %c0_i32 = arith.constant 0 : i32
    %c0_i32_0 = arith.constant 0 : i32
    return %arg0, %c0_i32 : i32, i32
  }
  func.func @transform_3(%arg0: i32) -> (i32, i32) {
    %c0_i32 = arith.constant 0 : i32
    %c0_i32_0 = arith.constant 0 : i32
    return %arg0, %c0_i32 : i32, i32
  }
  func.func @transform_4(%arg0: i32) -> (i32, i32) {
    %c0_i32 = arith.constant 0 : i32
    %c0_i32_0 = arith.constant 0 : i32
    return %arg0, %c0_i32 : i32, i32
  }
  func.func @transform_5(%arg0: i32) -> (i32, i32) {
    %c0_i32 = arith.constant 0 : i32
    %c0_i32_0 = arith.constant 0 : i32
    %c0_i32_1 = arith.constant 0 : i32
    return %c0_i32, %c0_i32_0 : i32, i32
  }
  func.func @transform_6(%arg0: i32) -> (i32, i32) {
    %c0_i32 = arith.constant 0 : i32
    %c0_i32_0 = arith.constant 0 : i32
    %c0_i32_1 = arith.constant 0 : i32
    return %c0_i32, %c0_i32_0 : i32, i32
  }
  func.func @transform_7(%arg0: i32) -> (i32, i32) {
    %c0_i32 = arith.constant 0 : i32
    %c0_i32_0 = arith.constant 0 : i32
    %c0_i32_1 = arith.constant 0 : i32
    return %c0_i32, %c0_i32_0 : i32, i32
  }
  func.func @transform_8(%arg0: i32) -> (i32, i32) {
    %c0_i32 = arith.constant 0 : i32
    %c0_i32_0 = arith.constant 0 : i32
    %c0_i32_1 = arith.constant 0 : i32
    return %c0_i32, %c0_i32_0 : i32, i32
  }
  func.func @transform_9(%arg0: i32) -> (i32, i32) {
    %c0_i32 = arith.constant 0 : i32
    %c0_i32_0 = arith.constant 0 : i32
    %c0_i32_1 = arith.constant 0 : i32
    return %c0_i32, %c0_i32_0 : i32, i32
  }
  func.func @transform_10(%arg0: i32) -> (i32, i32) {
    %c0_i32 = arith.constant 0 : i32
    %c0_i32_0 = arith.constant 0 : i32
    %c0_i32_1 = arith.constant 0 : i32
    return %c0_i32, %c0_i32_0 : i32, i32
  }
  func.func @transform_11(%arg0: i32) -> (i32, i32) {
    %c0_i32 = arith.constant 0 : i32
    %c0_i32_0 = arith.constant 0 : i32
    %c0_i32_1 = arith.constant 0 : i32
    return %c0_i32, %c0_i32_0 : i32, i32
  }
  func.func @transform_12(%arg0: i32) -> (i32, i32) {
    %c0_i32 = arith.constant 0 : i32
    %c0_i32_0 = arith.constant 0 : i32
    %c0_i32_1 = arith.constant 0 : i32
    return %c0_i32, %c0_i32_0 : i32, i32
  }
  func.func @transform_13(%arg0: i32) -> (i32, i32) {
    %c0_i32 = arith.constant 0 : i32
    %c0_i32_0 = arith.constant 0 : i32
    %c0_i32_1 = arith.constant 0 : i32
    return %c0_i32, %c0_i32_0 : i32, i32
  }
  func.func @transform_14(%arg0: i32) -> (i32, i32) {
    %c0_i32 = arith.constant 0 : i32
    %c0_i32_0 = arith.constant 0 : i32
    %c0_i32_1 = arith.constant 0 : i32
    return %c0_i32, %c0_i32_0 : i32, i32
  }
  func.func @transform_15(%arg0: i32) -> (i32, i32) {
    %c0_i32 = arith.constant 0 : i32
    %c0_i32_0 = arith.constant 0 : i32
    return %arg0, %c0_i32 : i32, i32
  }
}

</mosaic_0001>

<llo_original>
// kernel: tpu_custom_call.1
$region0: #{tpu_custom_call.1}
  #allocation0 [shape = 'u32[]', space=smem, size = 0x4, offset = 0x4, fixed_abs, tag = 'smem constant byte address 0x4 - core index']
  #allocation1 [shape = 'u32[72,128]{1,0:T(1,128)}', space=vmem, size = 0x9000, scoped, tag = 'internal scratch']
  %s0 = inlined_call_operand.hbm [shape: bf16[37,64], index: 0, kind: input, shape index: {}]
  %s1 = inlined_call_operand.hbm [shape: bf16[37,64], index: 1, kind: input, shape index: {}]
  %s2 = inlined_call_operand.hbm [shape: bf16[37,64], index: 2, kind: input, shape index: {}]
  %s3 = inlined_call_operand.vmem [shape: bf16[37,32], index: 3, kind: input, shape index: {}]
  %s4 = inlined_call_operand.vmem [shape: bf16[37,32], index: 4, kind: input, shape index: {}]
  %s5 = inlined_call_operand.hbm [shape: bf16[64,128], index: 5, kind: input, shape index: {}]
  %s6 = inlined_call_operand.hbm [shape: bf16[64,128], index: 6, kind: input, shape index: {}]
  %s7 = inlined_call_operand.hbm [shape: bf16[64,128], index: 7, kind: input, shape index: {}]
  %s8 = inlined_call_operand.hbm [shape: f32[1,128], index: 8, kind: input, shape index: {}]
  %s9 = inlined_call_operand.vmem [shape: bf16[128,128], index: 9, kind: input, shape index: {}]
  %s10 = inlined_call_operand.vmem [shape: bf16[32,64], index: 10, kind: input, shape index: {}]
  %s11 = inlined_call_operand.hbm [shape: bf16[32,64], index: 11, kind: input, shape index: {}]
  %s12 = inlined_call_operand.vmem [shape: f32[1,64], index: 12, kind: input, shape index: {}]
  %s13 = inlined_call_operand.hbm [shape: bf16[64,128], index: 13, kind: input, shape index: {}]
  %s14 = inlined_call_operand.vmem [shape: f32[1,128], index: 14, kind: input, shape index: {}]
  %s15 = inlined_call_operand.hbm [shape: f32[37,128], index: 15, kind: output, shape index: {}]
  %s16 = sld [smem:[#allocation0]]
  $region129: #{tpu_custom_call.1} parent=0
    _
  %s18 = ssub.s32 1, %s16
  %s19 = scalar_select 0, %s18, %s16
  $region1: #{tpu_custom_call.1} parent=0
    #allocation2 [shape = 'u8[12288]{0}', space=vmem, size = 0x3000, scoped, tag = 'input window, operand 0']
    #allocation3 [shape = 's32[2]{0}', space=sflag, size = 0x8, scoped, tag = 'scoped memory for tpu_custom_call.1']
    #allocation4 [shape = 's32[2]{0}', space=sflag, size = 0x8, scoped, tag = 'scoped memory for tpu_custom_call.1']
    #allocation5 [shape = 'u8[12288]{0}', space=vmem, size = 0x3000, scoped, tag = 'input window, operand 1']
    #allocation6 [shape = 's32[2]{0}', space=sflag, size = 0x8, scoped, tag = 'scoped memory for tpu_custom_call.1']
    #allocation7 [shape = 'u8[12288]{0}', space=vmem, size = 0x3000, scoped, tag = 'input window, operand 2']
    #allocation8 [shape = 'u8[16384]{0}', space=vmem, size = 0x4000, scoped, tag = 'input window, operand 5, single buffered']
    #allocation9 [shape = 's32[1]{0}', space=sflag, size = 0x4, scoped, tag = 'scoped memory for tpu_custom_call.1']
    #allocation10 [shape = 'u8[16384]{0}', space=vmem, size = 0x4000, scoped, tag = 'input window, operand 6, single buffered']
    #allocation11 [shape = 'u8[16384]{0}', space=vmem, size = 0x4000, scoped, tag = 'input window, operand 7, single buffered']
    #allocation12 [shape = 's32[1]{0}', space=sflag, size = 0x4, scoped, tag = 'scoped memory for tpu_custom_call.1']
    #allocation13 [shape = 'u8[512]{0}', space=vmem, size = 0x400, scoped, tag = 'input window, operand 8, single buffered']
    #allocation14 [shape = 'u8[8192]{0}', space=vmem, size = 0x2000, scoped, tag = 'input window, operand 11, single buffered']
    #allocation15 [shape = 's32[1]{0}', space=sflag, size = 0x4, scoped, tag = 'scoped memory for tpu_custom_call.1']
    #allocation16 [shape = 'u8[16384]{0}', space=vmem, size = 0x4000, scoped, tag = 'input window, operand 13, single buffered']
    #allocation17 [shape = 'u8[24576]{0}', space=vmem, size = 0x6000, scoped, tag = 'output window, operand 0']
    %20 = vsyncpa [#allocation3], 0
    %s21 = scalar_lea.sflag [#allocation3], 1
    %22 = vsyncpa %s21, 0
    %23 = vsyncpa [#allocation6], 0
    %s24 = scalar_lea.sflag [#allocation6], 1
    %25 = vsyncpa %s24, 0
    %26 = vsyncpa [#allocation9], 0
    %27 = vsyncpa [#allocation12], 0
    %28 = vsyncpa [#allocation15], 0
    %29 = vsyncpa [#allocation4], 0
    %s30 = scalar_lea.sflag [#allocation4], 1
    %31 = vsyncpa %s30, 0
    loop: start=0, step=1, limit=4
    $region2: #{tpu_custom_call.1} parent=1 // loop_pre_header
      _
    $region3: #{tpu_custom_call.1} parent=1 // loop_header
      %s33 = sphi 0, %s37
      %p34 = scmp.ge.s32.totalorder %s33, 4
      %s43 = sphi 0, %s45
      %s46 = sphi 0, %s43
      %s47 = sphi 0, %s46
      %s63 = sphi 0, %s47
      %s69 = sphi 0, %s71
      %s72 = sphi 0, %s69
      %s73 = sphi 0, %s72
      %s89 = sphi 0, %s73
      %s95 = sphi 0, %s97
      %s98 = sphi 0, %s95
      %s99 = sphi 0, %s98
      %s115 = sphi 0, %s99
      %s121 = sphi 0, %s123
      %s124 = sphi 0, %s121
      %s125 = sphi 0, %s124
      %s141 = sphi 0, %s125
      %s147 = sphi 0, %s149
      %s150 = sphi 0, %s147
      %s151 = sphi 0, %s150
      %s167 = sphi 0, %s151
      %s171 = sphi 0, %s171
      %s173 = sphi 0, %s171
      %s174 = sphi 0, %s173
      %s188 = sphi 0, %s174
      %s192 = sphi 0, %s192
      %s194 = sphi 0, %s192
      %s195 = sphi 0, %s194
      %s209 = sphi 0, %s195
      %s213 = sphi 0, %s213
      %s215 = sphi 0, %s213
      %s216 = sphi 0, %s215
      %s230 = sphi 0, %s216
      %s234 = sphi 0, %s234
      %s236 = sphi 0, %s234
      %s237 = sphi 0, %s236
      %s251 = sphi 0, %s237
      %s255 = sphi 0, %s255
      %s257 = sphi 0, %s255
      %s258 = sphi 0, %s257
      %s272 = sphi 0, %s258
      %s276 = sphi 0, %s276
      %s278 = sphi 0, %s276
      %s279 = sphi 0, %s278
      %s293 = sphi 0, %s279
      %s297 = sphi 0, %s297
      %s299 = sphi 0, %s297
      %s300 = sphi 0, %s299
      %s314 = sphi 0, %s300
      %s318 = sphi 0, %s318
      %s320 = sphi 0, %s318
      %s321 = sphi 0, %s320
      %s335 = sphi 0, %s321
      %s339 = sphi 0, %s339
      %s341 = sphi 0, %s339
      %s342 = sphi 0, %s341
      %s356 = sphi 0, %s342
      %s360 = sphi 0, %s360
      %s362 = sphi 0, %s360
      %s363 = sphi 0, %s362
      %s377 = sphi 0, %s363
      %s383 = sphi 0, %s385
      %s386 = sphi 0, %s383
      %s387 = sphi 0, %s386
      %s403 = sphi 0, %s387
    $region4: #{tpu_custom_call.1} parent=1 // loop_header_branch
      %36 = sbr.rel (%p34) target = $region8
    $region5: #{tpu_custom_call.1} parent=1 // loop_body
      %s38 = ssub.s32 %s33, 1
      %s39 = ssub.s32 %s33, 2
      %s40 = sadd.s32 %s33, 1
      %s41 = ssub.s32 %s33, %s40
      %p42 = scmp.eq.s32.totalorder %s41, 0
      %s44 = sadd.s32 %s43, 1
      %s45 = scalar_select %p42, %s43, %s44
      %p48 = pneg %p42
      %p49 = scmp.eq.s32.totalorder %s33, 1
      %p50 = por %p48, %p49
      %p51 = scmp.ne.s32.totalorder %s43, %s46
      %p52 = scmp.eq.s32.totalorder %s33, 0
      %p53 = por %p51, %p52
      %p54 = scmp.ne.s32.totalorder %s43, %s46
      %p55 = scmp.eq.s32.totalorder %s38, 1
      %p56 = por %p54, %p55
      %p57 = scmp.ne.s32.totalorder %s46, %s47
      %p58 = scmp.eq.s32.totalorder %s38, 0
      %p59 = por %p57, %p58
      %p60 = scmp.ne.s32.totalorder %s46, %s47
      %p61 = scmp.eq.s32.totalorder %s39, 1
      %p62 = por %p60, %p61
      %p64 = scmp.ne.s32.totalorder %s47, %s63
      %p65 = scmp.eq.s32.totalorder %s39, 0
      %p66 = por %p64, %p65
      %s67 = ssub.s32 %s33, %s40
      %p68 = scmp.eq.s32.totalorder %s67, 0
      %s70 = sadd.s32 %s69, 1
      %s71 = scalar_select %p68, %s69, %s70
      %p74 = pneg %p68
      %p75 = scmp.eq.s32.totalorder %s33, 1
      %p76 = por %p74, %p75
      %p77 = scmp.ne.s32.totalorder %s69, %s72
      %p78 = scmp.eq.s32.totalorder %s33, 0
      %p79 = por %p77, %p78
      %p80 = scmp.ne.s32.totalorder %s69, %s72
      %p81 = scmp.eq.s32.totalorder %s38, 1
      %p82 = por %p80, %p81
      %p83 = scmp.ne.s32.totalorder %s72, %s73
      %p84 = scmp.eq.s32.totalorder %s38, 0
      %p85 = por %p83, %p84
      %p86 = scmp.ne.s32.totalorder %s72, %s73
      %p87 = scmp.eq.s32.totalorder %s39, 1
      %p88 = por %p86, %p87
      %p90 = scmp.ne.s32.totalorder %s73, %s89
      %p91 = scmp.eq.s32.totalorder %s39, 0
      %p92 = por %p90, %p91
      %s93 = ssub.s32 %s33, %s40
      %p94 = scmp.eq.s32.totalorder %s93, 0
      %s96 = sadd.s32 %s95, 1
      %s97 = scalar_select %p94, %s95, %s96
      %p100 = pneg %p94
      %p101 = scmp.eq.s32.totalorder %s33, 1
      %p102 = por %p100, %p101
      %p103 = scmp.ne.s32.totalorder %s95, %s98
      %p104 = scmp.eq.s32.totalorder %s33, 0
      %p105 = por %p103, %p104
      %p106 = scmp.ne.s32.totalorder %s95, %s98
      %p107 = scmp.eq.s32.totalorder %s38, 1
      %p108 = por %p106, %p107
      %p109 = scmp.ne.s32.totalorder %s98, %s99
      %p110 = scmp.eq.s32.totalorder %s38, 0
      %p111 = por %p109, %p110
      %p112 = scmp.ne.s32.totalorder %s98, %s99
      %p113 = scmp.eq.s32.totalorder %s39, 1
      %p114 = por %p112, %p113
      %p116 = scmp.ne.s32.totalorder %s99, %s115
      %p117 = scmp.eq.s32.totalorder %s39, 0
      %p118 = por %p116, %p117
      %s119 = ssub.s32 %s33, %s40
      %p120 = scmp.eq.s32.totalorder %s119, 0
      %s122 = sadd.s32 %s121, 1
      %s123 = scalar_select %p120, %s121, %s122
      %p126 = pneg %p120
      %p127 = scmp.eq.s32.totalorder %s33, 1
      %p128 = por %p126, %p127
      %p129 = scmp.ne.s32.totalorder %s121, %s124
      %p130 = scmp.eq.s32.totalorder %s33, 0
      %p131 = por %p129, %p130
      %p132 = scmp.ne.s32.totalorder %s121, %s124
      %p133 = scmp.eq.s32.totalorder %s38, 1
      %p134 = por %p132, %p133
      %p135 = scmp.ne.s32.totalorder %s124, %s125
      %p136 = scmp.eq.s32.totalorder %s38, 0
      %p137 = por %p135, %p136
      %p138 = scmp.ne.s32.totalorder %s124, %s125
      %p139 = scmp.eq.s32.totalorder %s39, 1
      %p140 = por %p138, %p139
      %p142 = scmp.ne.s32.totalorder %s125, %s141
      %p143 = scmp.eq.s32.totalorder %s39, 0
      %p144 = por %p142, %p143
      %s145 = ssub.s32 %s33, %s40
      %p146 = scmp.eq.s32.totalorder %s145, 0
      %s148 = sadd.s32 %s147, 1
      %s149 = scalar_select %p146, %s147, %s148
      %p152 = pneg %p146
      %p153 = scmp.eq.s32.totalorder %s33, 1
      %p154 = por %p152, %p153
      %p155 = scmp.ne.s32.totalorder %s147, %s150
      %p156 = scmp.eq.s32.totalorder %s33, 0
      %p157 = por %p155, %p156
      %p158 = scmp.ne.s32.totalorder %s147, %s150
      %p159 = scmp.eq.s32.totalorder %s38, 1
      %p160 = por %p158, %p159
      %p161 = scmp.ne.s32.totalorder %s150, %s151
      %p162 = scmp.eq.s32.totalorder %s38, 0
      %p163 = por %p161, %p162
      %p164 = scmp.ne.s32.totalorder %s150, %s151
      %p165 = scmp.eq.s32.totalorder %s39, 1
      %p166 = por %p164, %p165
      %p168 = scmp.ne.s32.totalorder %s151, %s167
      %p169 = scmp.eq.s32.totalorder %s39, 0
      %p170 = por %p168, %p169
      %s172 = sadd.s32 %s171, 1
      %p175 = scmp.eq.s32.totalorder %s33, 1
      %p176 = scmp.ne.s32.totalorder %s171, %s173
      %p177 = scmp.eq.s32.totalorder %s33, 0
      %p178 = por %p176, %p177
      %p179 = scmp.ne.s32.totalorder %s171, %s173
      %p180 = scmp.eq.s32.totalorder %s38, 1
      %p181 = por %p179, %p180
      %p182 = scmp.ne.s32.totalorder %s173, %s174
      %p183 = scmp.eq.s32.totalorder %s38, 0
      %p184 = por %p182, %p183
      %p185 = scmp.ne.s32.totalorder %s173, %s174
      %p186 = scmp.eq.s32.totalorder %s39, 1
      %p187 = por %p185, %p186
      %p189 = scmp.ne.s32.totalorder %s174, %s188
      %p190 = scmp.eq.s32.totalorder %s39, 0
      %p191 = por %p189, %p190
      %s193 = sadd.s32 %s192, 1
      %p196 = scmp.eq.s32.totalorder %s33, 1
      %p197 = scmp.ne.s32.totalorder %s192, %s194
      %p198 = scmp.eq.s32.totalorder %s33, 0
      %p199 = por %p197, %p198
      %p200 = scmp.ne.s32.totalorder %s192, %s194
      %p201 = scmp.eq.s32.totalorder %s38, 1
      %p202 = por %p200, %p201
      %p203 = scmp.ne.s32.totalorder %s194, %s195
      %p204 = scmp.eq.s32.totalorder %s38, 0
      %p205 = por %p203, %p204
      %p206 = scmp.ne.s32.totalorder %s194, %s195
      %p207 = scmp.eq.s32.totalorder %s39, 1
      %p208 = por %p206, %p207
      %p210 = scmp.ne.s32.totalorder %s195, %s209
      %p211 = scmp.eq.s32.totalorder %s39, 0
      %p212 = por %p210, %p211
      %s214 = sadd.s32 %s213, 1
      %p217 = scmp.eq.s32.totalorder %s33, 1
      %p218 = scmp.ne.s32.totalorder %s213, %s215
      %p219 = scmp.eq.s32.totalorder %s33, 0
      %p220 = por %p218, %p219
      %p221 = scmp.ne.s32.totalorder %s213, %s215
      %p222 = scmp.eq.s32.totalorder %s38, 1
      %p223 = por %p221, %p222
      %p224 = scmp.ne.s32.totalorder %s215, %s216
      %p225 = scmp.eq.s32.totalorder %s38, 0
      %p226 = por %p224, %p225
      %p227 = scmp.ne.s32.totalorder %s215, %s216
      %p228 = scmp.eq.s32.totalorder %s39, 1
      %p229 = por %p227, %p228
      %p231 = scmp.ne.s32.totalorder %s216, %s230
      %p232 = scmp.eq.s32.totalorder %s39, 0
      %p233 = por %p231, %p232
      %s235 = sadd.s32 %s234, 1
      %p238 = scmp.eq.s32.totalorder %s33, 1
      %p239 = scmp.ne.s32.totalorder %s234, %s236
      %p240 = scmp.eq.s32.totalorder %s33, 0
      %p241 = por %p239, %p240
      %p242 = scmp.ne.s32.totalorder %s234, %s236
      %p243 = scmp.eq.s32.totalorder %s38, 1
      %p244 = por %p242, %p243
      %p245 = scmp.ne.s32.totalorder %s236, %s237
      %p246 = scmp.eq.s32.totalorder %s38, 0
      %p247 = por %p245, %p246
      %p248 = scmp.ne.s32.totalorder %s236, %s237
      %p249 = scmp.eq.s32.totalorder %s39, 1
      %p250 = por %p248, %p249
      %p252 = scmp.ne.s32.totalorder %s237, %s251
      %p253 = scmp.eq.s32.totalorder %s39, 0
      %p254 = por %p252, %p253
      %s256 = sadd.s32 %s255, 1
      %p259 = scmp.eq.s32.totalorder %s33, 1
      %p260 = scmp.ne.s32.totalorder %s255, %s257
      %p261 = scmp.eq.s32.totalorder %s33, 0
      %p262 = por %p260, %p261
      %p263 = scmp.ne.s32.totalorder %s255, %s257
      %p264 = scmp.eq.s32.totalorder %s38, 1
      %p265 = por %p263, %p264
      %p266 = scmp.ne.s32.totalorder %s257, %s258
      %p267 = scmp.eq.s32.totalorder %s38, 0
      %p268 = por %p266, %p267
      %p269 = scmp.ne.s32.totalorder %s257, %s258
      %p270 = scmp.eq.s32.totalorder %s39, 1
      %p271 = por %p269, %p270
      %p273 = scmp.ne.s32.totalorder %s258, %s272
      %p274 = scmp.eq.s32.totalorder %s39, 0
      %p275 = por %p273, %p274
      %s277 = sadd.s32 %s276, 1
      %p280 = scmp.eq.s32.totalorder %s33, 1
      %p281 = scmp.ne.s32.totalorder %s276, %s278
      %p282 = scmp.eq.s32.totalorder %s33, 0
      %p283 = por %p281, %p282
      %p284 = scmp.ne.s32.totalorder %s276, %s278
      %p285 = scmp.eq.s32.totalorder %s38, 1
      %p286 = por %p284, %p285
      %p287 = scmp.ne.s32.totalorder %s278, %s279
      %p288 = scmp.eq.s32.totalorder %s38, 0
      %p289 = por %p287, %p288
      %p290 = scmp.ne.s32.totalorder %s278, %s279
      %p291 = scmp.eq.s32.totalorder %s39, 1
      %p292 = por %p290, %p291
      %p294 = scmp.ne.s32.totalorder %s279, %s293
      %p295 = scmp.eq.s32.totalorder %s39, 0
      %p296 = por %p294, %p295
      %s298 = sadd.s32 %s297, 1
      %p301 = scmp.eq.s32.totalorder %s33, 1
      %p302 = scmp.ne.s32.totalorder %s297, %s299
      %p303 = scmp.eq.s32.totalorder %s33, 0
      %p304 = por %p302, %p303
      %p305 = scmp.ne.s32.totalorder %s297, %s299
      %p306 = scmp.eq.s32.totalorder %s38, 1
      %p307 = por %p305, %p306
      %p308 = scmp.ne.s32.totalorder %s299, %s300
      %p309 = scmp.eq.s32.totalorder %s38, 0
      %p310 = por %p308, %p309
      %p311 = scmp.ne.s32.totalorder %s299, %s300
      %p312 = scmp.eq.s32.totalorder %s39, 1
      %p313 = por %p311, %p312
      %p315 = scmp.ne.s32.totalorder %s300, %s314
      %p316 = scmp.eq.s32.totalorder %s39, 0
      %p317 = por %p315, %p316
      %s319 = sadd.s32 %s318, 1
      %p322 = scmp.eq.s32.totalorder %s33, 1
      %p323 = scmp.ne.s32.totalorder %s318, %s320
      %p324 = scmp.eq.s32.totalorder %s33, 0
      %p325 = por %p323, %p324
      %p326 = scmp.ne.s32.totalorder %s318, %s320
      %p327 = scmp.eq.s32.totalorder %s38, 1
      %p328 = por %p326, %p327
      %p329 = scmp.ne.s32.totalorder %s320, %s321
      %p330 = scmp.eq.s32.totalorder %s38, 0
      %p331 = por %p329, %p330
      %p332 = scmp.ne.s32.totalorder %s320, %s321
      %p333 = scmp.eq.s32.totalorder %s39, 1
      %p334 = por %p332, %p333
      %p336 = scmp.ne.s32.totalorder %s321, %s335
      %p337 = scmp.eq.s32.totalorder %s39, 0
      %p338 = por %p336, %p337
      %s340 = sadd.s32 %s339, 1
      %p343 = scmp.eq.s32.totalorder %s33, 1
      %p344 = scmp.ne.s32.totalorder %s339, %s341
      %p345 = scmp.eq.s32.totalorder %s33, 0
      %p346 = por %p344, %p345
      %p347 = scmp.ne.s32.totalorder %s339, %s341
      %p348 = scmp.eq.s32.totalorder %s38, 1
      %p349 = por %p347, %p348
      %p350 = scmp.ne.s32.totalorder %s341, %s342
      %p351 = scmp.eq.s32.totalorder %s38, 0
      %p352 = por %p350, %p351
      %p353 = scmp.ne.s32.totalorder %s341, %s342
      %p354 = scmp.eq.s32.totalorder %s39, 1
      %p355 = por %p353, %p354
      %p357 = scmp.ne.s32.totalorder %s342, %s356
      %p358 = scmp.eq.s32.totalorder %s39, 0
      %p359 = por %p357, %p358
      %s361 = sadd.s32 %s360, 1
      %p364 = scmp.eq.s32.totalorder %s33, 1
      %p365 = scmp.ne.s32.totalorder %s360, %s362
      %p366 = scmp.eq.s32.totalorder %s33, 0
      %p367 = por %p365, %p366
      %p368 = scmp.ne.s32.totalorder %s360, %s362
      %p369 = scmp.eq.s32.totalorder %s38, 1
      %p370 = por %p368, %p369
      %p371 = scmp.ne.s32.totalorder %s362, %s363
      %p372 = scmp.eq.s32.totalorder %s38, 0
      %p373 = por %p371, %p372
      %p374 = scmp.ne.s32.totalorder %s362, %s363
      %p375 = scmp.eq.s32.totalorder %s39, 1
      %p376 = por %p374, %p375
      %p378 = scmp.ne.s32.totalorder %s363, %s377
      %p379 = scmp.eq.s32.totalorder %s39, 0
      %p380 = por %p378, %p379
      %s381 = ssub.s32 %s33, %s40
      %p382 = scmp.eq.s32.totalorder %s381, 0
      %s384 = sadd.s32 %s383, 1
      %s385 = scalar_select %p382, %s383, %s384
      %p388 = pneg %p382
      %p389 = scmp.eq.s32.totalorder %s33, 1
      %p390 = por %p388, %p389
      %p391 = scmp.ne.s32.totalorder %s383, %s386
      %p392 = scmp.eq.s32.totalorder %s33, 0
      %p393 = por %p391, %p392
      %p394 = scmp.ne.s32.totalorder %s383, %s386
      %p395 = scmp.eq.s32.totalorder %s38, 1
      %p396 = por %p394, %p395
      %p397 = scmp.ne.s32.totalorder %s386, %s387
      %p398 = scmp.eq.s32.totalorder %s38, 0
      %p399 = por %p397, %p398
      %p400 = scmp.ne.s32.totalorder %s386, %s387
      %p401 = scmp.eq.s32.totalorder %s39, 1
      %p402 = por %p400, %p401
      %p404 = scmp.ne.s32.totalorder %s387, %s403
      %p405 = scmp.eq.s32.totalorder %s39, 0
      %p406 = por %p404, %p405
      %p407 = scmp.le.s32.totalorder 1, %s33
      %p408 = scmp.lt.s32.totalorder %s33, 3
      %p409 = pnand %p407, %p408
      %p410 = pneg %p409
      // Predicated region
      $region9: #{tpu_custom_call.1} parent=5 // pred_check
        _
      $region10: #{tpu_custom_call.1} parent=5 // pred_check_branch
        %412 = sbr.rel (%p409) target = $region12
      $region11: #{tpu_custom_call.1} parent=5 // pred_region
        %s413 = ssub.s32 %s33, 1
        // Predicated region
        $region13: #{tpu_custom_call.1} parent=11 // pred_check
          %p414 = pneg %p184
        $region14: #{tpu_custom_call.1} parent=11 // pred_check_branch
          %416 = sbr.rel (%p414) target = $region16
        $region15: #{tpu_custom_call.1} parent=11 // pred_region
          %418 = vsyncadd [#allocation9], 0
          %s419 = sshll.u32 %s5, 4
          %s420 = int_to_ptr.hbm [resolvable:$true] %s419
          %s421 = sshll.u32 [#allocation8], 4
          %s422 = int_to_ptr.vmem [resolvable:$true] %s421
          %427 = dma.hbm_to_vmem [thread:$0]  %s420, 512, %s422, [#allocation9], 64, 64, 4
        $region16: #{tpu_custom_call.1} parent=11 // pred_fallthru
          _
        // Predicated region
        $region17: #{tpu_custom_call.1} parent=11 // pred_check
          %p428 = pneg %p205
        $region18: #{tpu_custom_call.1} parent=11 // pred_check_branch
          %430 = sbr.rel (%p428) target = $region20
        $region19: #{tpu_custom_call.1} parent=11 // pred_region
          %432 = vsyncadd [#allocation9], 0
          %s433 = sshll.u32 %s6, 4
          %s434 = int_to_ptr.hbm [resolvable:$true] %s433
          %s435 = sshll.u32 [#allocation10], 4
          %s436 = int_to_ptr.vmem [resolvable:$true] %s435
          %441 = dma.hbm_to_vmem [thread:$0]  %s434, 512, %s436, [#allocation9], 64, 64, 4
        $region20: #{tpu_custom_call.1} parent=11 // pred_fallthru
          _
        // Predicated region
        $region21: #{tpu_custom_call.1} parent=11 // pred_check
          %p442 = pneg %p226
        $region22: #{tpu_custom_call.1} parent=11 // pred_check_branch
          %444 = sbr.rel (%p442) target = $region24
        $region23: #{tpu_custom_call.1} parent=11 // pred_region
          %446 = vsyncadd [#allocation12], 0
          %s447 = sshll.u32 %s7, 4
          %s448 = int_to_ptr.hbm [resolvable:$true] %s447
          %s449 = sshll.u32 [#allocation11], 4
          %s450 = int_to_ptr.vmem [resolvable:$true] %s449
          %455 = dma.hbm_to_vmem [thread:$0]  %s448, 512, %s450, [#allocation12], 64, 64, 4
        $region24: #{tpu_custom_call.1} parent=11 // pred_fallthru
          _
        // Predicated region
        $region25: #{tpu_custom_call.1} parent=11 // pred_check
          %p456 = pneg %p247
        $region26: #{tpu_custom_call.1} parent=11 // pred_check_branch
          %458 = sbr.rel (%p456) target = $region28
        $region27: #{tpu_custom_call.1} parent=11 // pred_region
          %460 = vsyncadd [#allocation12], 0
          %s462 = sshll.u32 %s8, 4
          %s463 = int_to_ptr.hbm [resolvable:$true] %s462
          %s464 = sshll.u32 [#allocation13], 4
          %s465 = int_to_ptr.vmem [resolvable:$true] %s464
          %467 = dma.hbm_to_vmem [thread:$0]  %s463, 16, %s465, [#allocation12]
        $region28: #{tpu_custom_call.1} parent=11 // pred_fallthru
          _
        // Predicated region
        $region29: #{tpu_custom_call.1} parent=11 // pred_check
          %p468 = pneg %p268
        $region30: #{tpu_custom_call.1} parent=11 // pred_check_branch
          %470 = sbr.rel (%p468) target = $region32
        $region31: #{tpu_custom_call.1} parent=11 // pred_region
          _
        $region32: #{tpu_custom_call.1} parent=11 // pred_fallthru
          _
        // Predicated region
        $region33: #{tpu_custom_call.1} parent=11 // pred_check
          %p471 = pneg %p289
        $region34: #{tpu_custom_call.1} parent=11 // pred_check_branch
          %473 = sbr.rel (%p471) target = $region36
        $region35: #{tpu_custom_call.1} parent=11 // pred_region
          _
        $region36: #{tpu_custom_call.1} parent=11 // pred_fallthru
          _
        // Predicated region
        $region37: #{tpu_custom_call.1} parent=11 // pred_check
          %p474 = pneg %p310
        $region38: #{tpu_custom_call.1} parent=11 // pred_check_branch
          %476 = sbr.rel (%p474) target = $region40
        $region39: #{tpu_custom_call.1} parent=11 // pred_region
          %478 = vsyncadd [#allocation15], 0
          %s479 = sshll.u32 %s11, 4
          %s480 = int_to_ptr.hbm [resolvable:$true] %s479
          %s481 = sshll.u32 [#allocation14], 4
          %s482 = int_to_ptr.vmem [resolvable:$true] %s481
          %487 = dma.hbm_to_vmem [thread:$0]  %s480, 256, %s482, [#allocation15], 64, 64, 4
        $region40: #{tpu_custom_call.1} parent=11 // pred_fallthru
          _
        // Predicated region
        $region41: #{tpu_custom_call.1} parent=11 // pred_check
          %p488 = pneg %p331
        $region42: #{tpu_custom_call.1} parent=11 // pred_check_branch
          %490 = sbr.rel (%p488) target = $region44
        $region43: #{tpu_custom_call.1} parent=11 // pred_region
          _
        $region44: #{tpu_custom_call.1} parent=11 // pred_fallthru
          _
        // Predicated region
        $region45: #{tpu_custom_call.1} parent=11 // pred_check
          %p491 = pneg %p352
        $region46: #{tpu_custom_call.1} parent=11 // pred_check_branch
          %493 = sbr.rel (%p491) target = $region48
        $region47: #{tpu_custom_call.1} parent=11 // pred_region
          %495 = vsyncadd [#allocation15], 0
          %s496 = sshll.u32 %s13, 4
          %s497 = int_to_ptr.hbm [resolvable:$true] %s496
          %s498 = sshll.u32 [#allocation16], 4
          %s499 = int_to_ptr.vmem [resolvable:$true] %s498
          %504 = dma.hbm_to_vmem [thread:$0]  %s497, 512, %s499, [#allocation15], 64, 64, 4
        $region48: #{tpu_custom_call.1} parent=11 // pred_fallthru
          _
        // Predicated region
        $region49: #{tpu_custom_call.1} parent=11 // pred_check
          %p505 = pneg %p373
        $region50: #{tpu_custom_call.1} parent=11 // pred_check_branch
          %507 = sbr.rel (%p505) target = $region52
        $region51: #{tpu_custom_call.1} parent=11 // pred_region
          _
        $region52: #{tpu_custom_call.1} parent=11 // pred_fallthru
          _
      $region12: #{tpu_custom_call.1} parent=5 // pred_fallthru
        _
      %p508 = scmp.lt.s32.totalorder %s33, 2
      // Predicated region
      $region53: #{tpu_custom_call.1} parent=5 // pred_check
        %p509 = pneg %p508
      $region54: #{tpu_custom_call.1} parent=5 // pred_check_branch
        %511 = sbr.rel (%p509) target = $region56
      $region55: #{tpu_custom_call.1} parent=5 // pred_region
        // Predicated region
        $region57: #{tpu_custom_call.1} parent=55 // pred_check
          %p512 = pneg %p53
        $region58: #{tpu_custom_call.1} parent=55 // pred_check_branch
          %514 = sbr.rel (%p512) target = $region60
        $region59: #{tpu_custom_call.1} parent=55 // pred_region
          %s515 = sand.u32 %s43, 1
          %s516 = scalar_lea.sflag [#allocation3], %s515
          %s517 = sand.u32 %s43, 1
          %s518 = smul.addr %s517, 12
          %s519 = scalar_lea.vmem [#allocation2], %s518
          %s520 = smul.u32 3, %s33
          %s521 = ssub.s32 5, %s520
          %p522 = scmp.lt.s32.totalorder %s521, 3
          %s523 = scalar_select %p522, %s521, 3
          %s524 = smul.u32 4, %s523
          %s525 = ssub.s32 12, %s524
          %s526 = sshll.u32 %s525, 4
          %527 = vsyncadd %s516, %s526
          %p528 = scmp.ne.s32.totalorder 0, %s524
          %s529 = smul.addr %s520, 4
          %s530 = scalar_lea.hbm %s0, %s529
          %s531 = smul.u32 4, %s523
          %s532 = sshll.u32 %s530, 4
          %s533 = int_to_ptr.hbm [resolvable:$true] %s532
          %s534 = sshll.u32 %s519, 4
          %s535 = int_to_ptr.vmem [resolvable:$true] %s534
          %s536 = sshll.u32 %s531, 4
          %540 = dma.hbm_to_vmem [thread:$0]  (%p528), %s533, %s536, %s535, %s516, 64, 64, 4
        $region60: #{tpu_custom_call.1} parent=55 // pred_fallthru
          _
        // Predicated region
        $region61: #{tpu_custom_call.1} parent=55 // pred_check
          %p541 = pneg %p79
        $region62: #{tpu_custom_call.1} parent=55 // pred_check_branch
          %543 = sbr.rel (%p541) target = $region64
        $region63: #{tpu_custom_call.1} parent=55 // pred_region
          %s544 = sand.u32 %s33, 1
          %s545 = scalar_lea.sflag [#allocation6], %s544
          %s546 = sand.u32 %s69, 1
          %s547 = smul.addr %s546, 12
          %s548 = scalar_lea.vmem [#allocation5], %s547
          %s549 = smul.u32 3, %s33
          %s550 = ssub.s32 5, %s549
          %p551 = scmp.lt.s32.totalorder %s550, 3
          %s552 = scalar_select %p551, %s550, 3
          %s553 = smul.u32 4, %s552
          %s554 = ssub.s32 12, %s553
          %s555 = sshll.u32 %s554, 4
          %556 = vsyncadd %s545, %s555
          %p557 = scmp.ne.s32.totalorder 0, %s553
          %s558 = smul.addr %s549, 4
          %s559 = scalar_lea.hbm %s1, %s558
          %s560 = smul.u32 4, %s552
          %s561 = sshll.u32 %s559, 4
          %s562 = int_to_ptr.hbm [resolvable:$true] %s561
          %s563 = sshll.u32 %s548, 4
          %s564 = int_to_ptr.vmem [resolvable:$true] %s563
          %s565 = sshll.u32 %s560, 4
          %569 = dma.hbm_to_vmem [thread:$0]  (%p557), %s562, %s565, %s564, %s545, 64, 64, 4
        $region64: #{tpu_custom_call.1} parent=55 // pred_fallthru
          _
        // Predicated region
        $region65: #{tpu_custom_call.1} parent=55 // pred_check
          %p570 = pneg %p105
        $region66: #{tpu_custom_call.1} parent=55 // pred_check_branch
          %572 = sbr.rel (%p570) target = $region68
        $region67: #{tpu_custom_call.1} parent=55 // pred_region
          %s573 = sand.u32 %s33, 1
          %s574 = scalar_lea.sflag [#allocation6], %s573
          %s575 = sand.u32 %s95, 1
          %s576 = smul.addr %s575, 12
          %s577 = scalar_lea.vmem [#allocation7], %s576
          %s578 = smul.u32 3, %s33
          %s579 = ssub.s32 5, %s578
          %p580 = scmp.lt.s32.totalorder %s579, 3
          %s581 = scalar_select %p580, %s579, 3
          %s582 = smul.u32 4, %s581
          %s583 = ssub.s32 12, %s582
          %s584 = sshll.u32 %s583, 4
          %585 = vsyncadd %s574, %s584
          %p586 = scmp.ne.s32.totalorder 0, %s582
          %s587 = smul.addr %s578, 4
          %s588 = scalar_lea.hbm %s2, %s587
          %s589 = smul.u32 4, %s581
          %s590 = sshll.u32 %s588, 4
          %s591 = int_to_ptr.hbm [resolvable:$true] %s590
          %s592 = sshll.u32 %s577, 4
          %s593 = int_to_ptr.vmem [resolvable:$true] %s592
          %s594 = sshll.u32 %s589, 4
          %598 = dma.hbm_to_vmem [thread:$0]  (%p586), %s591, %s594, %s593, %s574, 64, 64, 4
        $region68: #{tpu_custom_call.1} parent=55 // pred_fallthru
          _
        // Predicated region
        $region69: #{tpu_custom_call.1} parent=55 // pred_check
          %p599 = pneg %p131
        $region70: #{tpu_custom_call.1} parent=55 // pred_check_branch
          %601 = sbr.rel (%p599) target = $region72
        $region71: #{tpu_custom_call.1} parent=55 // pred_region
          %s602 = smul.u32 3, %s33
          %s603 = ssub.s32 5, %s602
          %p604 = scmp.lt.s32.totalorder %s603, 3
          %s605 = scalar_select %p604, %s603, 3
          %s606 = smul.u32 4, %s605
          %p607 = scmp.lt.s32.totalorder %s602, 4
          %s608 = scalar_select %p607, %s602, 4
          %s609 = smul.addr %s608, 4
          %s610 = scalar_lea.vmem %s3, %s609
          %s611 = smul.u32 3, %s33
          %s612 = ssub.s32 5, %s611
          %p613 = scmp.lt.s32.totalorder %s612, 3
          %s614 = scalar_select %p613, %s612, 3
          %s615 = smul.u32 4, %s614
        $region72: #{tpu_custom_call.1} parent=55 // pred_fallthru
          _
        // Predicated region
        $region73: #{tpu_custom_call.1} parent=55 // pred_check
          %p616 = pneg %p157
        $region74: #{tpu_custom_call.1} parent=55 // pred_check_branch
          %618 = sbr.rel (%p616) target = $region76
        $region75: #{tpu_custom_call.1} parent=55 // pred_region
          %s619 = smul.u32 3, %s33
          %s620 = ssub.s32 5, %s619
          %p621 = scmp.lt.s32.totalorder %s620, 3
          %s622 = scalar_select %p621, %s620, 3
          %s623 = smul.u32 4, %s622
          %p624 = scmp.lt.s32.totalorder %s619, 4
          %s625 = scalar_select %p624, %s619, 4
          %s626 = smul.addr %s625, 4
          %s627 = scalar_lea.vmem %s4, %s626
          %s628 = smul.u32 3, %s33
          %s629 = ssub.s32 5, %s628
          %p630 = scmp.lt.s32.totalorder %s629, 3
          %s631 = scalar_select %p630, %s629, 3
          %s632 = smul.u32 4, %s631
        $region76: #{tpu_custom_call.1} parent=55 // pred_fallthru
          _
      $region56: #{tpu_custom_call.1} parent=5 // pred_fallthru
        _
      %p633 = scmp.le.s32.totalorder 1, %s33
      %p634 = scmp.lt.s32.totalorder %s33, 3
      %p635 = pnand %p633, %p634
      %p636 = pneg %p635
      // Predicated region
      $region77: #{tpu_custom_call.1} parent=5 // pred_check
        _
      $region78: #{tpu_custom_call.1} parent=5 // pred_check_branch
        %638 = sbr.rel (%p635) target = $region80
      $region79: #{tpu_custom_call.1} parent=5 // pred_region
        %s639 = ssub.s32 %s33, 1
        %s640 = sand.u32 %s46, 1
        %s641 = scalar_lea.sflag [#allocation3], %s640
        %s642 = sand.u32 %s46, 1
        %s643 = smul.addr %s642, 12
        %s644 = scalar_lea.vmem [#allocation2], %s643
        // Predicated region
        $region81: #{tpu_custom_call.1} parent=79 // pred_check
          %p645 = pneg %p59
        $region82: #{tpu_custom_call.1} parent=79 // pred_check_branch
          %647 = sbr.rel (%p645) target = $region84
        $region83: #{tpu_custom_call.1} parent=79 // pred_region
          %649 = dma.done %s641, 192
        $region84: #{tpu_custom_call.1} parent=79 // pred_fallthru
          _
        %s650 = sand.u32 %s38, 1
        %s651 = scalar_lea.sflag [#allocation6], %s650
        %s652 = sand.u32 %s72, 1
        %s653 = smul.addr %s652, 12
        %s654 = scalar_lea.vmem [#allocation5], %s653
        // Predicated region
        $region85: #{tpu_custom_call.1} parent=79 // pred_check
          %p655 = pneg %p85
        $region86: #{tpu_custom_call.1} parent=79 // pred_check_branch
          %657 = sbr.rel (%p655) target = $region88
        $region87: #{tpu_custom_call.1} parent=79 // pred_region
          %659 = dma.done %s651, 192
        $region88: #{tpu_custom_call.1} parent=79 // pred_fallthru
          _
        %s660 = sand.u32 %s38, 1
        %s661 = scalar_lea.sflag [#allocation6], %s660
        %s662 = sand.u32 %s98, 1
        %s663 = smul.addr %s662, 12
        %s664 = scalar_lea.vmem [#allocation7], %s663
        // Predicated region
        $region89: #{tpu_custom_call.1} parent=79 // pred_check
          %p665 = pneg %p111
        $region90: #{tpu_custom_call.1} parent=79 // pred_check_branch
          %667 = sbr.rel (%p665) target = $region92
        $region91: #{tpu_custom_call.1} parent=79 // pred_region
          %669 = dma.done %s661, 192
        $region92: #{tpu_custom_call.1} parent=79 // pred_fallthru
          _
        // Predicated region
        $region93: #{tpu_custom_call.1} parent=79 // pred_check
          %p670 = pneg %p184
        $region94: #{tpu_custom_call.1} parent=79 // pred_check_branch
          %672 = sbr.rel (%p670) target = $region96
        $region95: #{tpu_custom_call.1} parent=79 // pred_region
          %674 = dma.done [#allocation9], 512
        $region96: #{tpu_custom_call.1} parent=79 // pred_fallthru
          _
        // Predicated region
        $region97: #{tpu_custom_call.1} parent=79 // pred_check
          %p675 = pneg %p205
        $region98: #{tpu_custom_call.1} parent=79 // pred_check_branch
          %677 = sbr.rel (%p675) target = $region100
        $region99: #{tpu_custom_call.1} parent=79 // pred_region
          %679 = dma.done [#allocation9], 512
        $region100: #{tpu_custom_call.1} parent=79 // pred_fallthru
          _
        // Predicated region
        $region101: #{tpu_custom_call.1} parent=79 // pred_check
          %p680 = pneg %p226
        $region102: #{tpu_custom_call.1} parent=79 // pred_check_branch
          %682 = sbr.rel (%p680) target = $region104
        $region103: #{tpu_custom_call.1} parent=79 // pred_region
          %684 = dma.done [#allocation12], 512
        $region104: #{tpu_custom_call.1} parent=79 // pred_fallthru
          _
        // Predicated region
        $region105: #{tpu_custom_call.1} parent=79 // pred_check
          %p685 = pneg %p247
        $region106: #{tpu_custom_call.1} parent=79 // pred_check_branch
          %687 = sbr.rel (%p685) target = $region108
        $region107: #{tpu_custom_call.1} parent=79 // pred_region
          %689 = dma.done [#allocation12], 16
        $region108: #{tpu_custom_call.1} parent=79 // pred_fallthru
          _
        // Predicated region
        $region109: #{tpu_custom_call.1} parent=79 // pred_check
          %p690 = pneg %p310
        $region110: #{tpu_custom_call.1} parent=79 // pred_check_branch
          %692 = sbr.rel (%p690) target = $region112
        $region111: #{tpu_custom_call.1} parent=79 // pred_region
          %694 = dma.done [#allocation15], 256
        $region112: #{tpu_custom_call.1} parent=79 // pred_fallthru
          _
        // Predicated region
        $region113: #{tpu_custom_call.1} parent=79 // pred_check
          %p695 = pneg %p352
        $region114: #{tpu_custom_call.1} parent=79 // pred_check_branch
          %697 = sbr.rel (%p695) target = $region116
        $region115: #{tpu_custom_call.1} parent=79 // pred_region
          %699 = dma.done [#allocation15], 512
        $region116: #{tpu_custom_call.1} parent=79 // pred_fallthru
          _
        %s700 = sand.u32 %s46, 1
        %s701 = scalar_lea.sflag [#allocation3], %s700
        %s702 = sand.u32 %s46, 1
        %s703 = smul.addr %s702, 12
        %s704 = scalar_lea.vmem [#allocation2], %s703
        %p705 = pneg %p59
        %p706 = pneg %p56
        %s707 = sand.u32 %s38, 1
        %s708 = scalar_lea.sflag [#allocation6], %s707
        %s709 = sand.u32 %s72, 1
        %s710 = smul.addr %s709, 12
        %s711 = scalar_lea.vmem [#allocation5], %s710
        %p712 = pneg %p85
        %p713 = pneg %p82
        %s714 = sand.u32 %s38, 1
        %s715 = scalar_lea.sflag [#allocation6], %s714
        %s716 = sand.u32 %s98, 1
        %s717 = smul.addr %s716, 12
        %s718 = scalar_lea.vmem [#allocation7], %s717
        %p719 = pneg %p111
        %p720 = pneg %p108
        %s721 = smul.u32 3, %s38
        %s722 = ssub.s32 5, %s721
        %p723 = scmp.lt.s32.totalorder %s722, 3
        %s724 = scalar_select %p723, %s722, 3
        %s725 = smul.u32 4, %s724
        %p726 = scmp.lt.s32.totalorder %s721, 4
        %s727 = scalar_select %p726, %s721, 4
        %s728 = smul.addr %s727, 4
        %s729 = scalar_lea.vmem %s3, %s728
        %p730 = pneg %p137
        %p731 = pneg %p134
        %s732 = smul.u32 3, %s38
        %s733 = ssub.s32 5, %s732
        %p734 = scmp.lt.s32.totalorder %s733, 3
        %s735 = scalar_select %p734, %s733, 3
        %s736 = smul.u32 4, %s735
        %p737 = scmp.lt.s32.totalorder %s732, 4
        %s738 = scalar_select %p737, %s732, 4
        %s739 = smul.addr %s738, 4
        %s740 = scalar_lea.vmem %s4, %s739
        %p741 = pneg %p163
        %p742 = pneg %p160
        %p743 = pneg %p184
        %p744 = pneg %p181
        %p745 = pneg %p205
        %p746 = pneg %p202
        %p747 = pneg %p226
        %p748 = pneg %p223
        %p749 = pneg %p247
        %p750 = pneg %p244
        %p751 = pneg %p268
        %p752 = pneg %p265
        %p753 = pneg %p289
        %p754 = pneg %p286
        %p755 = pneg %p310
        %p756 = pneg %p307
        %p757 = pneg %p331
        %p758 = pneg %p328
        %p759 = pneg %p352
        %p760 = pneg %p349
        %p761 = pneg %p373
        %p762 = pneg %p370
        %p763 = pneg %p399
        %p764 = pneg %p396
        %s765 = sand.u32 %s386, 1
        %s766 = scalar_lea.sflag [#allocation4], %s765
        %s767 = sand.u32 %s386, 1
        %s768 = smul.addr %s767, 24
        %s769 = scalar_lea.vmem [#allocation17], %s768
        %s770 = smul.u32 3, %s38
        %s771 = ssub.s32 5, %s770
        %p772 = scmp.lt.s32.totalorder %s771, 3
        %s773 = scalar_select %p772, %s771, 3
        %s774 = smul.u32 4, %s773
        %s775 = smul.u32 3, %s38
        %s776 = ssub.s32 5, %s775
        %p777 = scmp.lt.s32.totalorder %s776, 3
        %s778 = scalar_select %p777, %s776, 3
        %s779 = smul.u32 4, %s778
        %s780 = smul.u32 3, %s38
        %s781 = ssub.s32 5, %s780
        %p782 = scmp.lt.s32.totalorder %s781, 3
        %s783 = scalar_select %p782, %s781, 3
        %s784 = smul.u32 4, %s783
        %s785 = smul.u32 3, %s38
        %s786 = ssub.s32 5, %s785
        %p787 = scmp.lt.s32.totalorder %s786, 3
        %s788 = scalar_select %p787, %s786, 3
        %s789 = smul.u32 4, %s788
        %p790 = scmp.lt.s32.totalorder %s785, 4
        %s791 = scalar_select %p790, %s785, 4
        %s792 = smul.addr %s791, 4
        %s793 = scalar_lea.vmem %s3, %s792
        %s794 = smul.u32 3, %s38
        %s795 = ssub.s32 5, %s794
        %p796 = scmp.lt.s32.totalorder %s795, 3
        %s797 = scalar_select %p796, %s795, 3
        %s798 = smul.u32 4, %s797
        %s799 = smul.u32 3, %s38
        %s800 = ssub.s32 5, %s799
        %p801 = scmp.lt.s32.totalorder %s800, 3
        %s802 = scalar_select %p801, %s800, 3
        %s803 = smul.u32 4, %s802
        %p804 = scmp.lt.s32.totalorder %s799, 4
        %s805 = scalar_select %p804, %s799, 4
        %s806 = smul.addr %s805, 4
        %s807 = scalar_lea.vmem %s4, %s806
        %s808 = smul.u32 3, %s38
        %s809 = ssub.s32 5, %s808
        %p810 = scmp.lt.s32.totalorder %s809, 3
        %s811 = scalar_select %p810, %s809, 3
        %s812 = smul.u32 4, %s811
        %s813 = smul.u32 3, %s38
        %s814 = ssub.s32 5, %s813
        %p815 = scmp.lt.s32.totalorder %s814, 3
        %s816 = scalar_select %p815, %s814, 3
        %s817 = smul.u32 8, %s816
        %v819 = vld [vmem:[%s644] sm:$0xf]
        %v820 = vld [vmem:[%s644 + $0x4] sm:$0xf]
        %v821 = vld [vmem:[%s644 + $0x8] sm:$0xf]
        %v822 = vld [vmem:[#allocation8] sm:$0xf]
        %v823 = vld [vmem:[#allocation8 + $0x4] sm:$0xf]
        %v824 = vld [vmem:[#allocation8 + $0x8] sm:$0xf]
        %v825 = vld [vmem:[#allocation8 + $0xc] sm:$0xf]
        %v826 = vld [vmem:[#allocation8 + $0x10] sm:$0xf]
        %v827 = vld [vmem:[#allocation8 + $0x14] sm:$0xf]
        %v828 = vld [vmem:[#allocation8 + $0x18] sm:$0xf]
        %v829 = vld [vmem:[#allocation8 + $0x1c] sm:$0xf]
        %v830 = vld [vmem:[%s654] sm:$0xf]
        %v831 = vld [vmem:[%s654 + $0x4] sm:$0xf]
        %v832 = vld [vmem:[%s654 + $0x8] sm:$0xf]
        %v833 = vld [vmem:[#allocation10] sm:$0xf]
        %v834 = vld [vmem:[#allocation10 + $0x4] sm:$0xf]
        %v835 = vld [vmem:[#allocation10 + $0x8] sm:$0xf]
        %v836 = vld [vmem:[#allocation10 + $0xc] sm:$0xf]
        %v837 = vld [vmem:[#allocation10 + $0x10] sm:$0xf]
        %v838 = vld [vmem:[#allocation10 + $0x14] sm:$0xf]
        %v839 = vld [vmem:[#allocation10 + $0x18] sm:$0xf]
        %v840 = vld [vmem:[#allocation10 + $0x1c] sm:$0xf]
        %v844 = vunpack.c.l.b16 %v830
        %v845 = vunpack.c.l.b16 %v831
        %v846 = vunpack.c.l.b16 %v832
        %v847 = vpack.c.b16 %v845, %v844
        %v848 = vpack.c.b16 %v846, %v846
        %v857 = vunpack.c.l.b16 %v833
        %v858 = vunpack.c.l.b16 %v834
        %v859 = vunpack.c.l.b16 %v835
        %v860 = vunpack.c.l.b16 %v836
        %v861 = vunpack.c.l.b16 %v837
        %v862 = vunpack.c.l.b16 %v838
        %v863 = vunpack.c.l.b16 %v839
        %v864 = vunpack.c.l.b16 %v840
        %v865 = vpack.c.b16 %v858, %v857
        %v866 = vpack.c.b16 %v860, %v859
        %v867 = vpack.c.b16 %v862, %v861
        %v868 = vpack.c.b16 %v864, %v863
        %vm873 = vcmask 523264
        %v875 = vsel %vm873, %v847, 0
        %v878 = vsel %vm873, %v848, 0
        %880 = vmatpush.bf16.msra.mxu0 0
        %881 = vmatpush.bf16.msra.mxu0 0
        %882 = vmatpush.bf16.msra.mxu0 0
        %883 = vmatpush.bf16.msra.mxu0 0
        %884 = vmatpush.bf16.msra.mxu0 %v868
        %885 = vmatpush.bf16.msra.mxu0 %v867
        %886 = vmatpush.bf16.msra.mxu0 %v866
        %887 = vmatpush.bf16.msra.mxu0 %v865
        %888 = vmatmul.bf16.gmra.mxu0 %v875
        %v889 = vpop.f32.mrf.mxu0
        %v890 = vadd.f32 0.0, %v889
        %v891 = vpop.f32.mrf.mxu0
        %v892 = vadd.f32 0.0, %v891
        %893 = vmatmul.bf16.gmra.mxu0 %v878
        %v894 = vpop.f32.mrf.mxu0
        %v895 = vadd.f32 0.0, %v894
        %v896 = vpop.f32.mrf.mxu0
        %897 = vdwg.mxu0
        %v901 = vunpack.c.l.b16 %v819
        %v902 = vunpack.c.l.b16 %v820
        %v903 = vunpack.c.l.b16 %v821
        %v904 = vpack.c.b16 %v902, %v901
        %v905 = vpack.c.b16 %v903, %v903
        %v914 = vunpack.c.l.b16 %v822
        %v915 = vunpack.c.l.b16 %v823
        %v916 = vunpack.c.l.b16 %v824
        %v917 = vunpack.c.l.b16 %v825
        %v918 = vunpack.c.l.b16 %v826
        %v919 = vunpack.c.l.b16 %v827
        %v920 = vunpack.c.l.b16 %v828
        %v921 = vunpack.c.l.b16 %v829
        %v922 = vpack.c.b16 %v915, %v914
        %v923 = vpack.c.b16 %v917, %v916
        %v924 = vpack.c.b16 %v919, %v918
        %v925 = vpack.c.b16 %v921, %v920
        %v931 = vsel %vm873, %v904, 0
        %v934 = vsel %vm873, %v905, 0
        %936 = vmatpush.bf16.msra.mxu0 0
        %937 = vmatpush.bf16.msra.mxu0 0
        %938 = vmatpush.bf16.msra.mxu0 0
        %939 = vmatpush.bf16.msra.mxu0 0
        %940 = vmatpush.bf16.msra.mxu0 %v925
        %941 = vmatpush.bf16.msra.mxu0 %v924
        %942 = vmatpush.bf16.msra.mxu0 %v923
        %943 = vmatpush.bf16.msra.mxu0 %v922
        %944 = vmatmul.bf16.gmra.mxu0 %v931
        %v945 = vpop.f32.mrf.mxu0
        %v946 = vadd.f32 %v890, %v945
        %v947 = vpop.f32.mrf.mxu0
        %v948 = vadd.f32 %v892, %v947
        %949 = vmatmul.bf16.gmra.mxu0 %v934
        %v950 = vpop.f32.mrf.mxu0
        %v951 = vadd.f32 %v895, %v950
        %v952 = vpop.f32.mrf.mxu0
        %953 = vdwg.mxu0
        %v954 = vld [vmem:[%s664] sm:$0xf]
        %v955 = vld [vmem:[%s664 + $0x4] sm:$0xf]
        %v956 = vld [vmem:[%s664 + $0x8] sm:$0xf]
        %v957 = vld [vmem:[#allocation11] sm:$0xf]
        %v958 = vld [vmem:[#allocation11 + $0x4] sm:$0xf]
        %v959 = vld [vmem:[#allocation11 + $0x8] sm:$0xf]
        %v960 = vld [vmem:[#allocation11 + $0xc] sm:$0xf]
        %v961 = vld [vmem:[#allocation11 + $0x10] sm:$0xf]
        %v962 = vld [vmem:[#allocation11 + $0x14] sm:$0xf]
        %v963 = vld [vmem:[#allocation11 + $0x18] sm:$0xf]
        %v964 = vld [vmem:[#allocation11 + $0x1c] sm:$0xf]
        %v968 = vunpack.c.l.b16 %v954
        %v969 = vunpack.c.l.b16 %v955
        %v970 = vunpack.c.l.b16 %v956
        %v971 = vpack.c.b16 %v969, %v968
        %v972 = vpack.c.b16 %v970, %v970
        %v981 = vunpack.c.l.b16 %v957
        %v982 = vunpack.c.l.b16 %v958
        %v983 = vunpack.c.l.b16 %v959
        %v984 = vunpack.c.l.b16 %v960
        %v985 = vunpack.c.l.b16 %v961
        %v986 = vunpack.c.l.b16 %v962
        %v987 = vunpack.c.l.b16 %v963
        %v988 = vunpack.c.l.b16 %v964
        %v989 = vpack.c.b16 %v982, %v981
        %v990 = vpack.c.b16 %v984, %v983
        %v991 = vpack.c.b16 %v986, %v985
        %v992 = vpack.c.b16 %v988, %v987
        %v998 = vsel %vm873, %v971, 0
        %v1001 = vsel %vm873, %v972, 0
        %1003 = vmatpush.bf16.msra.mxu0 0
        %1004 = vmatpush.bf16.msra.mxu0 0
        %1005 = vmatpush.bf16.msra.mxu0 0
        %1006 = vmatpush.bf16.msra.mxu0 0
        %1007 = vmatpush.bf16.msra.mxu0 %v992
        %1008 = vmatpush.bf16.msra.mxu0 %v991
        %1009 = vmatpush.bf16.msra.mxu0 %v990
        %1010 = vmatpush.bf16.msra.mxu0 %v989
        %1011 = vmatmul.bf16.gmra.mxu0 %v998
        %v1012 = vpop.f32.mrf.mxu0
        %v1013 = vadd.f32 0.0, %v1012
        %v1014 = vpop.f32.mrf.mxu0
        %v1015 = vadd.f32 0.0, %v1014
        %1016 = vmatmul.bf16.gmra.mxu0 %v1001
        %v1017 = vpop.f32.mrf.mxu0
        %v1018 = vadd.f32 0.0, %v1017
        %v1019 = vpop.f32.mrf.mxu0
        %1020 = vdwg.mxu0
        %v1021 = vadd.f32 %v946, %v1013
        %v1022 = vadd.f32 %v948, %v1015
        %v1023 = vadd.f32 %v951, %v1018
        %v1024 = vld [vmem:[#allocation13] sm:$0x1]
        %v1026 = vperm.slane %v1024, 0
        %v1028 = vadd.f32 %v1021, %v1026
        %v1029 = vadd.f32 %v1022, %v1026
        %v1030 = vadd.f32 %v1023, %v1026
        %v1031 = vmax.f32 %v1028, 0.0
        %v1032 = vmax.f32 %v1029, 0.0
        %v1033 = vmax.f32 %v1030, 0.0
        %v1034 = vpack.c.bf16 %v1032, %v1031
        %v1035 = vpack.c.bf16 %v1033, %v1033
        %v1036 = vld [vmem:[%s793] sm:$0xf]
        %v1037 = vld [vmem:[%s793 + $0x4] sm:$0xf]
        %v1038 = vld [vmem:[%s793 + $0x8] sm:$0xf]
        %v1039 = vld [vmem:[%s10] sm:$0xf]
        %v1040 = vld [vmem:[%s10 + $0x4] sm:$0xf]
        %v1041 = vld [vmem:[%s10 + $0x8] sm:$0xf]
        %v1042 = vld [vmem:[%s10 + $0xc] sm:$0xf]
        %v1043 = vld [vmem:[%s807] sm:$0xf]
        %v1044 = vld [vmem:[%s807 + $0x4] sm:$0xf]
        %v1045 = vld [vmem:[%s807 + $0x8] sm:$0xf]
        %v1046 = vld [vmem:[#allocation14] sm:$0xf]
        %v1047 = vld [vmem:[#allocation14 + $0x4] sm:$0xf]
        %v1048 = vld [vmem:[#allocation14 + $0x8] sm:$0xf]
        %v1049 = vld [vmem:[#allocation14 + $0xc] sm:$0xf]
        %v1053 = vunpack.c.l.b16 %v1043
        %v1054 = vunpack.c.l.b16 %v1044
        %v1055 = vunpack.c.l.b16 %v1045
        %v1056 = vpack.c.b16 %v1054, %v1053
        %v1057 = vpack.c.b16 %v1055, %v1055
        %v1062 = vunpack.c.l.b16 %v1046
        %v1063 = vunpack.c.l.b16 %v1047
        %v1064 = vunpack.c.l.b16 %v1048
        %v1065 = vunpack.c.l.b16 %v1049
        %v1066 = vpack.c.b16 %v1063, %v1062
        %v1067 = vpack.c.b16 %v1065, %v1064
        %vm1070 = vcmask 261120
        %v1072 = vsel %vm1070, %v1056, 0
        %v1075 = vsel %vm1070, %v1057, 0
        %1077 = vmatpush.bf16.msra.mxu0 0
        %1078 = vmatpush.bf16.msra.mxu0 0
        %1079 = vmatpush.bf16.msra.mxu0 0
        %1080 = vmatpush.bf16.msra.mxu0 0
        %1081 = vmatpush.bf16.msra.mxu0 0
        %1082 = vmatpush.bf16.msra.mxu0 0
        %1083 = vmatpush.bf16.msra.mxu0 %v1067
        %1084 = vmatpush.bf16.msra.mxu0 %v1066
        %1085 = vmatmul.bf16.gmra.mxu0 %v1072
        %v1086 = vpop.f32.mrf.mxu0
        %v1087 = vadd.f32 0.0, %v1086
        %v1088 = vpop.f32.mrf.mxu0
        %v1089 = vadd.f32 0.0, %v1088
        %1090 = vmatmul.bf16.gmra.mxu0 %v1075
        %v1091 = vpop.f32.mrf.mxu0
        %v1092 = vadd.f32 0.0, %v1091
        %v1093 = vpop.f32.mrf.mxu0
        %1094 = vdwg.mxu0
        %v1098 = vunpack.c.l.b16 %v1036
        %v1099 = vunpack.c.l.b16 %v1037
        %v1100 = vunpack.c.l.b16 %v1038
        %v1101 = vpack.c.b16 %v1099, %v1098
        %v1102 = vpack.c.b16 %v1100, %v1100
        %v1107 = vunpack.c.l.b16 %v1039
        %v1108 = vunpack.c.l.b16 %v1040
        %v1109 = vunpack.c.l.b16 %v1041
        %v1110 = vunpack.c.l.b16 %v1042
        %v1111 = vpack.c.b16 %v1108, %v1107
        %v1112 = vpack.c.b16 %v1110, %v1109
        %v1116 = vsel %vm1070, %v1101, 0
        %v1119 = vsel %vm1070, %v1102, 0
        %1121 = vmatpush.bf16.msra.mxu0 0
        %1122 = vmatpush.bf16.msra.mxu0 0
        %1123 = vmatpush.bf16.msra.mxu0 0
        %1124 = vmatpush.bf16.msra.mxu0 0
        %1125 = vmatpush.bf16.msra.mxu0 0
        %1126 = vmatpush.bf16.msra.mxu0 0
        %1127 = vmatpush.bf16.msra.mxu0 %v1112
        %1128 = vmatpush.bf16.msra.mxu0 %v1111
        %1129 = vmatmul.bf16.gmra.mxu0 %v1116
        %v1130 = vpop.f32.mrf.mxu0
        %v1131 = vadd.f32 %v1087, %v1130
        %v1132 = vpop.f32.mrf.mxu0
        %v1133 = vadd.f32 %v1089, %v1132
        %1134 = vmatmul.bf16.gmra.mxu0 %v1119
        %v1135 = vpop.f32.mrf.mxu0
        %v1136 = vadd.f32 %v1092, %v1135
        %v1137 = vpop.f32.mrf.mxu0
        %1138 = vdwg.mxu0
        %v1139 = vld [vmem:[%s12] sm:$0x1]
        %v1141 = vperm.slane %v1139, 0
        %v1143 = vadd.f32 %v1131, %v1141
        %v1144 = vadd.f32 %v1133, %v1141
        %v1145 = vadd.f32 %v1136, %v1141
        %v1146 = vmax.f32 %v1143, 0.0
        %v1147 = vmax.f32 %v1144, 0.0
        %v1148 = vmax.f32 %v1145, 0.0
        %v1149 = vpack.c.bf16 %v1147, %v1146
        %v1150 = vpack.c.bf16 %v1148, %v1148
        %v1151 = vld [vmem:[%s9] sm:$0xf]
        %v1152 = vld [vmem:[%s9 + $0x4] sm:$0xf]
        %v1153 = vld [vmem:[%s9 + $0x8] sm:$0xf]
        %v1154 = vld [vmem:[%s9 + $0xc] sm:$0xf]
        %v1155 = vld [vmem:[%s9 + $0x10] sm:$0xf]
        %v1156 = vld [vmem:[%s9 + $0x14] sm:$0xf]
        %v1157 = vld [vmem:[%s9 + $0x18] sm:$0xf]
        %v1158 = vld [vmem:[%s9 + $0x1c] sm:$0xf]
        %v1159 = vld [vmem:[%s9 + $0x20] sm:$0xf]
        %v1160 = vld [vmem:[%s9 + $0x24] sm:$0xf]
        %v1161 = vld [vmem:[%s9 + $0x28] sm:$0xf]
        %v1162 = vld [vmem:[%s9 + $0x2c] sm:$0xf]
        %v1163 = vld [vmem:[%s9 + $0x30] sm:$0xf]
        %v1164 = vld [vmem:[%s9 + $0x34] sm:$0xf]
        %v1165 = vld [vmem:[%s9 + $0x38] sm:$0xf]
        %v1166 = vld [vmem:[%s9 + $0x3c] sm:$0xf]
        %v1167 = vld [vmem:[#allocation16] sm:$0xf]
        %v1168 = vld [vmem:[#allocation16 + $0x4] sm:$0xf]
        %v1169 = vld [vmem:[#allocation16 + $0x8] sm:$0xf]
        %v1170 = vld [vmem:[#allocation16 + $0xc] sm:$0xf]
        %v1171 = vld [vmem:[#allocation16 + $0x10] sm:$0xf]
        %v1172 = vld [vmem:[#allocation16 + $0x14] sm:$0xf]
        %v1173 = vld [vmem:[#allocation16 + $0x18] sm:$0xf]
        %v1174 = vld [vmem:[#allocation16 + $0x1c] sm:$0xf]
        %v1183 = vunpack.c.l.b16 %v1167
        %v1184 = vunpack.c.l.b16 %v1168
        %v1185 = vunpack.c.l.b16 %v1169
        %v1186 = vunpack.c.l.b16 %v1170
        %v1187 = vunpack.c.l.b16 %v1171
        %v1188 = vunpack.c.l.b16 %v1172
        %v1189 = vunpack.c.l.b16 %v1173
        %v1190 = vunpack.c.l.b16 %v1174
        %v1191 = vpack.c.b16 %v1184, %v1183
        %v1192 = vpack.c.b16 %v1186, %v1185
        %v1193 = vpack.c.b16 %v1188, %v1187
        %v1194 = vpack.c.b16 %v1190, %v1189
        %v1200 = vsel %vm873, %v1149, 0
        %v1203 = vsel %vm873, %v1150, 0
        %1205 = vmatpush.bf16.msra.mxu0 0
        %1206 = vmatpush.bf16.msra.mxu0 0
        %1207 = vmatpush.bf16.msra.mxu0 0
        %1208 = vmatpush.bf16.msra.mxu0 0
        %1209 = vmatpush.bf16.msra.mxu0 %v1194
        %1210 = vmatpush.bf16.msra.mxu0 %v1193
        %1211 = vmatpush.bf16.msra.mxu0 %v1192
        %1212 = vmatpush.bf16.msra.mxu0 %v1191
        %1213 = vmatmul.bf16.gmra.mxu0 %v1200
        %v1214 = vpop.f32.mrf.mxu0
        %v1215 = vadd.f32 0.0, %v1214
        %v1216 = vpop.f32.mrf.mxu0
        %v1217 = vadd.f32 0.0, %v1216
        %1218 = vmatmul.bf16.gmra.mxu0 %v1203
        %v1219 = vpop.f32.mrf.mxu0
        %v1220 = vadd.f32 0.0, %v1219
        %v1221 = vpop.f32.mrf.mxu0
        %1222 = vdwg.mxu0
        %v1239 = vunpack.c.l.b16 %v1151
        %v1240 = vunpack.c.l.b16 %v1152
        %v1241 = vunpack.c.l.b16 %v1153
        %v1242 = vunpack.c.l.b16 %v1154
        %v1243 = vunpack.c.l.b16 %v1155
        %v1244 = vunpack.c.l.b16 %v1156
        %v1245 = vunpack.c.l.b16 %v1157
        %v1246 = vunpack.c.l.b16 %v1158
        %v1247 = vunpack.c.l.b16 %v1159
        %v1248 = vunpack.c.l.b16 %v1160
        %v1249 = vunpack.c.l.b16 %v1161
        %v1250 = vunpack.c.l.b16 %v1162
        %v1251 = vunpack.c.l.b16 %v1163
        %v1252 = vunpack.c.l.b16 %v1164
        %v1253 = vunpack.c.l.b16 %v1165
        %v1254 = vunpack.c.l.b16 %v1166
        %v1255 = vpack.c.b16 %v1240, %v1239
        %v1256 = vpack.c.b16 %v1242, %v1241
        %v1257 = vpack.c.b16 %v1244, %v1243
        %v1258 = vpack.c.b16 %v1246, %v1245
        %v1259 = vpack.c.b16 %v1248, %v1247
        %v1260 = vpack.c.b16 %v1250, %v1249
        %v1261 = vpack.c.b16 %v1252, %v1251
        %v1262 = vpack.c.b16 %v1254, %v1253
        %1271 = vmatpush.bf16.msra.mxu0 %v1262
        %1272 = vmatpush.bf16.msra.mxu0 %v1261
        %1273 = vmatpush.bf16.msra.mxu0 %v1260
        %1274 = vmatpush.bf16.msra.mxu0 %v1259
        %1275 = vmatpush.bf16.msra.mxu0 %v1258
        %1276 = vmatpush.bf16.msra.mxu0 %v1257
        %1277 = vmatpush.bf16.msra.mxu0 %v1256
        %1278 = vmatpush.bf16.msra.mxu0 %v1255
        %1279 = vmatmul.bf16.gmra.mxu0 %v1034
        %v1280 = vpop.f32.mrf.mxu0
        %v1281 = vadd.f32 %v1215, %v1280
        %v1282 = vpop.f32.mrf.mxu0
        %v1283 = vadd.f32 %v1217, %v1282
        %1284 = vmatmul.bf16.gmra.mxu0 %v1035
        %v1285 = vpop.f32.mrf.mxu0
        %v1286 = vadd.f32 %v1220, %v1285
        %v1287 = vpop.f32.mrf.mxu0
        %1288 = vdwg.mxu0
        %v1289 = vld [vmem:[%s14] sm:$0x1]
        %v1291 = vperm.slane %v1289, 0
        %v1293 = vadd.f32 %v1281, %v1291
        %v1294 = vadd.f32 %v1283, %v1291
        %v1295 = vadd.f32 %v1286, %v1291
        %v1296 = vmax.f32 %v1293, 0.0
        %v1297 = vmax.f32 %v1294, 0.0
        %v1298 = vmax.f32 %v1295, 0.0
        %1299 = vst [vmem:[%s769] sm:$0xff] %v1296
        %1300 = vst [vmem:[%s769 + $0x8] sm:$0xff] %v1297
        %1301 = vst [vmem:[%s769 + $0x10] sm:$0xff] %v1298
        %s1302 = sand.u32 %s386, 1
        %s1303 = scalar_lea.sflag [#allocation4], %s1302
        %s1304 = sand.u32 %s386, 1
        %s1305 = smul.addr %s1304, 24
        %s1306 = scalar_lea.vmem [#allocation17], %s1305
        // Predicated region
        $region117: #{tpu_custom_call.1} parent=79 // pred_check
          %p1307 = pneg %p396
        $region118: #{tpu_custom_call.1} parent=79 // pred_check_branch
          %1309 = sbr.rel (%p1307) target = $region120
        $region119: #{tpu_custom_call.1} parent=79 // pred_region
          %s1310 = smul.u32 3, %s38
          %s1311 = ssub.s32 5, %s1310
          %p1312 = scmp.lt.s32.totalorder %s1311, 3
          %s1313 = scalar_select %p1312, %s1311, 3
          %s1314 = smul.u32 8, %s1313
          %s1315 = ssub.s32 24, %s1314
          %s1316 = sshll.u32 %s1315, 4
          %1317 = vsyncadd %s1303, %s1316
          %p1318 = scmp.ne.s32.totalorder 0, %s1314
          %s1319 = smul.addr %s1310, 8
          %s1320 = scalar_lea.hbm %s15, %s1319
          %s1321 = smul.u32 8, %s1313
          %s1322 = sshll.u32 %s1306, 4
          %s1323 = int_to_ptr.vmem [resolvable:$true] %s1322
          %s1324 = sshll.u32 %s1320, 4
          %s1325 = int_to_ptr.hbm [resolvable:$true] %s1324
          %s1326 = sshll.u32 %s1321, 4
          %1330 = dma.vmem_to_hbm [thread:$0]  (%p1318), %s1323, %s1326, %s1325, %s1303, 128, 128, 8
        $region120: #{tpu_custom_call.1} parent=79 // pred_fallthru
          _
      $region80: #{tpu_custom_call.1} parent=5 // pred_fallthru
        _
      %p1331 = scmp.le.s32.totalorder 2, %s33
      // Predicated region
      $region121: #{tpu_custom_call.1} parent=5 // pred_check
        %p1332 = pneg %p1331
      $region122: #{tpu_custom_call.1} parent=5 // pred_check_branch
        %1334 = sbr.rel (%p1332) target = $region124
      $region123: #{tpu_custom_call.1} parent=5 // pred_region
        %s1335 = ssub.s32 %s33, 2
        // Predicated region
        $region125: #{tpu_custom_call.1} parent=123 // pred_check
          %p1336 = pneg %p402
        $region126: #{tpu_custom_call.1} parent=123 // pred_check_branch
          %1338 = sbr.rel (%p1336) target = $region128
        $region127: #{tpu_custom_call.1} parent=123 // pred_region
          %s1339 = sand.u32 %s387, 1
          %s1340 = scalar_lea.sflag [#allocation4], %s1339
          %s1341 = sand.u32 %s387, 1
          %s1342 = smul.addr %s1341, 24
          %s1343 = scalar_lea.vmem [#allocation17], %s1342
          %1345 = dma.done %s1340, 384
        $region128: #{tpu_custom_call.1} parent=123 // pred_fallthru
          _
      $region124: #{tpu_custom_call.1} parent=5 // pred_fallthru
        _
    $region6: #{tpu_custom_call.1} parent=1 // loop_footer
      %s37 = sadd.s32 1, %s33
    $region7: #{tpu_custom_call.1} parent=1 // loop_footer_branch
      %32 = sbr.rel target = $region3
    $region8: #{tpu_custom_call.1} parent=1 // loop_exit
      _
    %1346 = vsyncpa [#allocation3], 1
    %s1347 = scalar_lea.sflag [#allocation3], 1
    %1348 = vsyncpa %s1347, 1
    %1349 = vsyncpa [#allocation6], 1
    %s1350 = scalar_lea.sflag [#allocation6], 1
    %1351 = vsyncpa %s1350, 1
    %1352 = vsyncpa [#allocation9], 1
    %1353 = vsyncpa [#allocation12], 1
    %1354 = vsyncpa [#allocation15], 1
    %1355 = vsyncpa [#allocation4], 1
    %s1356 = scalar_lea.sflag [#allocation4], 1
    %1357 = vsyncpa %s1356, 1

</llo_original>
